<compile_context>
chip_gen: v7x
topology: tpu7x:2x2x1
jax: 0.10.0
libtpu: 0.0.40
codegen_flags: <defaults>
</compile_context>

<pallas_src>
import functools

import jax
import jax.numpy as jnp
import numpy as np
from jax.experimental import pallas as pl
from jax.experimental.pallas import tpu as pltpu

LANE = 128
SUBLANE = 8


# ----------------------------- Pallas kernel ------------------------------ #
def _gru_seq_kernel(x_ref, h0_ref,
                    wih_ref, whh_ref, bi_ref, bhn_ref,
                    wout_ref, bout_ref,
                    s_ref, hn_ref,
                    gi_buf, y_buf):
    """Whole GRU recurrence + hoisted input/output projections.

    x_ref:    (T, Bp, D)    time-major inputs, bf16, batch padded to 8
    h0_ref:   (1, Bp, Hp)   initial hidden (lane/sublane padded), f32
    wih_ref:  (D, 3*Hp)     fused [W_ir | W_iz | W_in]^T, bf16
    whh_ref:  (Hp, 3*Hp)    fused [W_hr | W_hz | W_hn]^T, bf16
    bi_ref:   (1, 3*Hp)     [b_ir+b_hr | b_iz+b_hz | b_in], f32
    bhn_ref:  (1, Hp)       b_hn, f32
    wout_ref: (Hp, Op)      output linear weight^T, bf16
    bout_ref: (1, Op)       output linear bias, f32
    s_ref:    (T*Bp, Op)    output_linear(hiddens), row t*Bp+b, f32
    hn_ref:   (1, Bp, Hp)   final hidden, f32
    gi_buf:   (T, Bp, 3*Hp) VMEM scratch: hoisted input projection
    y_buf:    (T, Bp, Hp)   VMEM scratch: per-step hidden states
    """
    T, Bp, D = x_ref.shape
    Hp = whh_ref.shape[0]

    # -- hoisted input projection: ONE (T*Bp, D) @ (D, 3*Hp) MXU matmul ------
    x2d = x_ref[...].reshape(T * Bp, D)
    gi = jnp.dot(x2d, wih_ref[...],
                 preferred_element_type=jnp.float32) + bi_ref[...]
    gi_buf[...] = gi.reshape(T, Bp, 3 * Hp)

    whh = whh_ref[...]                                    # loaded once (bf16)
    b_hn = jnp.broadcast_to(bhn_ref[...], (Bp, Hp))       # broadcast once

    def step(t, h_prev):
        gi_t = gi_buf[t]                                  # (Bp, 3*Hp)
        # ONE fused recurrent matmul per step on the serial chain.
        gh = jnp.dot(h_prev.astype(whh.dtype), whh,
                     preferred_element_type=jnp.float32)  # (Bp, 3*Hp)
        # Static lane slices at 128-multiples: free (no XLU shuffle).
        r = jax.nn.sigmoid(gi_t[:, 0 * Hp:1 * Hp] + gh[:, 0 * Hp:1 * Hp])
        z = jax.nn.sigmoid(gi_t[:, 1 * Hp:2 * Hp] + gh[:, 1 * Hp:2 * Hp])
        n = jnp.tanh(gi_t[:, 2 * Hp:3 * Hp]
                     + r * (gh[:, 2 * Hp:3 * Hp] + b_hn))
        h_new = (1.0 - z) * n + z * h_prev
        y_buf[t] = h_new                                  # full (8,128) tile store
        return h_new

    h_last = jax.lax.fori_loop(0, T, step, h0_ref[0], unroll=True)

    # Final hidden: written exactly once.
    hn_ref[0] = h_last

    # -- hoisted output linear: ONE (T*Bp, Hp) @ (Hp, Op) matmul -------------
    hs = y_buf[...].reshape(T * Bp, Hp).astype(wout_ref.dtype)
    s_ref[...] = (jnp.dot(hs, wout_ref[...],
                          preferred_element_type=jnp.float32)
                  + bout_ref[...])


# ------------------------------ Wrapper ------------------------------------ #
def state_tracker_gru_forward(inp, last_hidden, kparams, *, hidden_dim, output_dim):
    """Matches StateTrackerGRU.forward.

    inp:         (B, T, D)  -- batch_first, like the PyTorch module
    last_hidden: (1, B, H)
    returns (s_t, hidden): s_t = output_linear(x.squeeze()), hidden = (1, B, H)
    """
    B, T, D = inp.shape
    H, O = hidden_dim, output_dim
    Hp = kparams["whh"].shape[0]
    Op = kparams["wout"].shape[1]
    Bp = max(SUBLANE, ((B + SUBLANE - 1) // SUBLANE) * SUBLANE)

    # time-major, bf16 inputs, zero-pad batch to Bp sublanes
    x_tbd = jnp.transpose(inp, (1, 0, 2)).astype(jnp.bfloat16)
    x_tbd = jnp.pad(x_tbd, ((0, 0), (0, Bp - B), (0, 0)))
    h0 = jnp.pad(last_hidden.astype(jnp.float32),
                 ((0, 0), (0, Bp - B), (0, Hp - H)))       # sublane+lane pad

    s_pad, hn_pad = pl.pallas_call(
        _gru_seq_kernel,
        out_shape=(
            jax.ShapeDtypeStruct((T * Bp, Op), jnp.float32),  # output_linear, all steps
            jax.ShapeDtypeStruct((1, Bp, Hp), jnp.float32),   # final hidden
        ),
        grid_spec=pltpu.PrefetchScalarGridSpec(
            num_scalar_prefetch=0,
            grid=(1,),
            in_specs=[
                pl.BlockSpec((T, Bp, D), lambda i: (0, 0, 0)),    # x (time-major)
                pl.BlockSpec((1, Bp, Hp), lambda i: (0, 0, 0)),   # h0 (padded)
                pl.BlockSpec((D, 3 * Hp), lambda i: (0, 0)),      # fused W_ih^T
                pl.BlockSpec((Hp, 3 * Hp), lambda i: (0, 0)),     # fused W_hh^T
                pl.BlockSpec((1, 3 * Hp), lambda i: (0, 0)),      # folded input biases
                pl.BlockSpec((1, Hp), lambda i: (0, 0)),          # b_hn
                pl.BlockSpec((Hp, Op), lambda i: (0, 0)),         # W_out^T (padded)
                pl.BlockSpec((1, Op), lambda i: (0, 0)),          # b_out (padded)
            ],
            out_specs=[
                pl.BlockSpec((T * Bp, Op), lambda i: (0, 0)),
                pl.BlockSpec((1, Bp, Hp), lambda i: (0, 0, 0)),
            ],
            scratch_shapes=[
                pltpu.VMEM((T, Bp, 3 * Hp), jnp.float32),  # hoisted input projection
                pltpu.VMEM((T, Bp, Hp), jnp.float32),      # per-step hiddens
            ],
        ),
        compiler_params=pltpu.CompilerParams(
            dimension_semantics=("arbitrary",)),
    )(x_tbd, h0,
      kparams["wih"], kparams["whh"], kparams["bi"], kparams["b_hn"],
      kparams["wout"], kparams["bout"])

    # (T*Bp, Op) -> (B, T, O), trim batch/lane padding.
    s_bto = jnp.transpose(s_pad.reshape(T, Bp, Op)[:, :B, :O], (1, 0, 2))
    # PyTorch: output_linear(x.squeeze()); squeeze removes size-1 dims.
    s_t = jnp.squeeze(s_bto)
    hidden = hn_pad[:, :B, :H]
    return s_t, hidden


# -------------------- deterministic parameter init ------------------------- #
def init_params(key, input_dim, hidden_dim, output_dim):
    """Raw PyTorch-layout parameters (as nn.GRU / nn.Linear would hold them)."""
    k = 1.0 / np.sqrt(hidden_dim)
    ks = jax.random.split(key, 6)
    return {
        "wih": jax.random.uniform(ks[0], (3 * hidden_dim, input_dim), jnp.float32, -k, k),
        "whh": jax.random.uniform(ks[1], (3 * hidden_dim, hidden_dim), jnp.float32, -k, k),
        "bih": jax.random.uniform(ks[2], (3 * hidden_dim,), jnp.float32, -k, k),
        "bhh": jax.random.uniform(ks[3], (3 * hidden_dim,), jnp.float32, -k, k),
        "wout": jax.random.uniform(ks[4], (output_dim, hidden_dim), jnp.float32, -k, k),
        "bout": jax.random.uniform(ks[5], (output_dim,), jnp.float32, -k, k),
    }


def prepare_kernel_params(raw, hidden_dim, output_dim, lane=LANE):
    """Split per gate, transpose to (in,out), fuse gates along lanes,
    fold r/z input+hidden biases, lane-pad to 128, cast weights to bf16."""
    H, O = hidden_dim, output_dim
    Hp = max(lane, ((H + lane - 1) // lane) * lane)
    Op = max(lane, ((O + lane - 1) // lane) * lane)
    wih, whh = raw["wih"], raw["whh"]          # (3H, D), (3H, H)
    bih, bhh = raw["bih"], raw["bhh"]          # (3H,)
    wout, bout = raw["wout"], raw["bout"]      # (O, H), (O,)
    D = wih.shape[1]

    gate = lambda w, g: w[g * H:(g + 1) * H]   # (H, D) or (H, H)

    def padT(w, rows, cols):                   # (H, in) -> (in, Hp-padded)
        wt = w.T
        return jnp.pad(wt, ((0, rows - wt.shape[0]), (0, cols - wt.shape[1])))

    def padb(b):
        return jnp.pad(b, (0, Hp - b.shape[0]))

    wih_f = jnp.concatenate([padT(gate(wih, 0), D, Hp),
                             padT(gate(wih, 1), D, Hp),
                             padT(gate(wih, 2), D, Hp)], axis=1)
    whh_f = jnp.concatenate([padT(gate(whh, 0), Hp, Hp),
                             padT(gate(whh, 1), Hp, Hp),
                             padT(gate(whh, 2), Hp, Hp)], axis=1)
    bi_f = jnp.concatenate([padb(bih[0:H] + bhh[0:H]),
                            padb(bih[H:2 * H] + bhh[H:2 * H]),
                            padb(bih[2 * H:3 * H])])[None, :]

    return {
        "wih": wih_f.astype(jnp.bfloat16),                 # (D, 3*Hp)
        "whh": whh_f.astype(jnp.bfloat16),                 # (Hp, 3*Hp)
        "bi": bi_f,                                        # (1, 3*Hp) f32
        "b_hn": padb(bhh[2 * H:3 * H])[None, :],           # (1, Hp)   f32
        "wout": jnp.pad(wout.T, ((0, Hp - H), (0, Op - O))).astype(jnp.bfloat16),
        "bout": jnp.pad(bout, (0, Op - O))[None, :],       # (1, Op)   f32
    }


# ------------------------- pure-JAX reference ------------------------------ #
def reference_forward(inp, last_hidden, raw):
    wih, whh, bih, bhh = raw["wih"], raw["whh"], raw["bih"], raw["bhh"]
    wout, bout = raw["wout"], raw["bout"]
    H = whh.shape[1]
    hi = jax.lax.Precision.HIGHEST

    def step(h, x_t):
        gi = jnp.dot(x_t, wih.T, precision=hi) + bih
        gh = jnp.dot(h, whh.T, precision=hi) + bhh
        r = jax.nn.sigmoid(gi[:, :H] + gh[:, :H])
        z = jax.nn.sigmoid(gi[:, H:2 * H] + gh[:, H:2 * H])
        n = jnp.tanh(gi[:, 2 * H:] + r * gh[:, 2 * H:])
        h_new = (1.0 - z) * n + z * h
        return h_new, h_new

    x_tbd = jnp.transpose(inp, (1, 0, 2))
    h_last, ys = jax.lax.scan(step, last_hidden[0], x_tbd)
    x_bth = jnp.transpose(ys, (1, 0, 2))
    s = jnp.dot(jnp.squeeze(x_bth), wout.T, precision=hi) + bout
    return s, h_last[None]


# --------------------------------- main ------------------------------------ #
if __name__ == "__main__":
    B, T = 2, 8                 # batch, sequence length
    INPUT_DIM, HIDDEN_DIM, OUTPUT_DIM = 32, 32, 16

    key = jax.random.PRNGKey(0)
    k_inp, k_hid, k_par = jax.random.split(key, 3)

    inp = jax.random.normal(k_inp, (B, T, INPUT_DIM), dtype=jnp.float32)
    last_hidden = jax.random.normal(k_hid, (1, B, HIDDEN_DIM), dtype=jnp.float32)
    raw_params = init_params(k_par, INPUT_DIM, HIDDEN_DIM, OUTPUT_DIM)
    kparams = prepare_kernel_params(raw_params, HIDDEN_DIM, OUTPUT_DIM)

    fwd = jax.jit(functools.partial(state_tracker_gru_forward,
                                    hidden_dim=HIDDEN_DIM, output_dim=OUTPUT_DIM))
    s_t, hidden = fwd(inp, last_hidden, kparams)
    s_t, hidden = jax.block_until_ready((s_t, hidden))

    s_ref, h_ref = reference_forward(inp, last_hidden, raw_params)
    # bf16 MXU inputs (f32 accumulation) vs f32 HIGHEST reference -> 3e-2 tol.
    np.testing.assert_allclose(np.asarray(s_t), np.asarray(s_ref), rtol=3e-2, atol=3e-2)
    np.testing.assert_allclose(np.asarray(hidden), np.asarray(h_ref), rtol=3e-2, atol=3e-2)

    assert s_t.shape == (B, T, OUTPUT_DIM)
    assert hidden.shape == (1, B, HIDDEN_DIM)
    print("KERNEL_OK")
</pallas_src>

<mosaic_0001>
module attributes {stable_mosaic.version = 11 : i64} {
  func.func @_gru_seq_kernel(%arg0: i32, %arg1: memref<8x8x32xbf16, #tpu.memory_space<vmem>>, %arg2: memref<1x8x128xf32, #tpu.memory_space<vmem>>, %arg3: memref<32x384xbf16, #tpu.memory_space<vmem>>, %arg4: memref<128x384xbf16, #tpu.memory_space<vmem>>, %arg5: memref<1x384xf32, #tpu.memory_space<vmem>>, %arg6: memref<1x128xf32, #tpu.memory_space<vmem>>, %arg7: memref<128x128xbf16, #tpu.memory_space<vmem>>, %arg8: memref<1x128xf32, #tpu.memory_space<vmem>>, %arg9: memref<64x128xf32, #tpu.memory_space<vmem>>, %arg10: memref<1x8x128xf32, #tpu.memory_space<vmem>>, %arg11: memref<8x8x384xf32, #tpu.memory_space<vmem>>, %arg12: memref<8x8x128xf32, #tpu.memory_space<vmem>>) attributes {dimension_semantics = [#tpu.dimension_semantics<arbitrary>], iteration_bounds = array<i64: 1>, scalar_prefetch = 0 : i64, scratch_operands = 2 : i64, tpu.core_type = #tpu.core_type<tc>, window_params = [{pipeline_mode = #tpu.pipeline_mode<synchronous>, transform_indices = @transform_0, window_bounds = array<i64: 8, 8, 32>}, {pipeline_mode = #tpu.pipeline_mode<synchronous>, transform_indices = @transform_1, window_bounds = array<i64: 1, 8, 128>}, {pipeline_mode = #tpu.pipeline_mode<synchronous>, transform_indices = @transform_2, window_bounds = array<i64: 32, 384>}, {pipeline_mode = #tpu.pipeline_mode<synchronous>, transform_indices = @transform_3, window_bounds = array<i64: 128, 384>}, {pipeline_mode = #tpu.pipeline_mode<synchronous>, transform_indices = @transform_4, window_bounds = array<i64: 1, 384>}, {pipeline_mode = #tpu.pipeline_mode<synchronous>, transform_indices = @transform_5, window_bounds = array<i64: 1, 128>}, {pipeline_mode = #tpu.pipeline_mode<synchronous>, transform_indices = @transform_6, window_bounds = array<i64: 128, 128>}, {pipeline_mode = #tpu.pipeline_mode<synchronous>, transform_indices = @transform_7, window_bounds = array<i64: 1, 128>}, {pipeline_mode = #tpu.pipeline_mode<synchronous>, transform_indices = @transform_8, window_bounds = array<i64: 64, 128>}, {pipeline_mode = #tpu.pipeline_mode<synchronous>, transform_indices = @transform_9, window_bounds = array<i64: 1, 8, 128>}]} {
    %c0 = arith.constant 0 : index
    %c0_0 = arith.constant 0 : index
    %c0_1 = arith.constant 0 : index
    %0 = vector.load %arg1[%c0, %c0_0, %c0_1] : memref<8x8x32xbf16, #tpu.memory_space<vmem>>, vector<8x8x32xbf16>
    %1 = vector.shape_cast %0 : vector<8x8x32xbf16> to vector<64x32xbf16>
    %c0_2 = arith.constant 0 : index
    %c0_3 = arith.constant 0 : index
    %2 = vector.load %arg3[%c0_2, %c0_3] : memref<32x384xbf16, #tpu.memory_space<vmem>>, vector<32x384xbf16>
    %cst = arith.constant dense<0.000000e+00> : vector<64x384xf32>
    %3 = tpu.matmul %1, %2, %cst {dimension_numbers = #tpu.dot_dimension_numbers<[1], [0], [0], [1], [0, 0, 1, 1], [], []>} : vector<64x32xbf16>, vector<32x384xbf16>, vector<64x384xf32> -> vector<64x384xf32>
    %c0_4 = arith.constant 0 : index
    %c0_5 = arith.constant 0 : index
    %4 = vector.load %arg5[%c0_4, %c0_5] : memref<1x384xf32, #tpu.memory_space<vmem>>, vector<1x384xf32>
    %5 = vector.broadcast %4 : vector<1x384xf32> to vector<64x384xf32>
    %6 = arith.addf %3, %5 : vector<64x384xf32>
    %7 = vector.shape_cast %6 : vector<64x384xf32> to vector<8x8x384xf32>
    %c0_6 = arith.constant 0 : index
    %c0_7 = arith.constant 0 : index
    %c0_8 = arith.constant 0 : index
    %8 = vector.load %arg11[%c0_6, %c0_7, %c0_8] : memref<8x8x384xf32, #tpu.memory_space<vmem>>, vector<8x8x384xf32>
    tpu.vector_store %arg11[%c0_6, %c0_7, %c0_8], %7 {strides = array<i32>} : memref<8x8x384xf32, #tpu.memory_space<vmem>>, vector<8x8x384xf32>,
    %c0_9 = arith.constant 0 : index
    %c0_10 = arith.constant 0 : index
    %9 = vector.load %arg4[%c0_9, %c0_10] : memref<128x384xbf16, #tpu.memory_space<vmem>>, vector<128x384xbf16>
    %c0_11 = arith.constant 0 : index
    %c0_12 = arith.constant 0 : index
    %10 = vector.load %arg6[%c0_11, %c0_12] : memref<1x128xf32, #tpu.memory_space<vmem>>, vector<1x128xf32>
    %11 = vector.shape_cast %10 : vector<1x128xf32> to vector<1x128xf32>
    %12 = vector.broadcast %11 : vector<1x128xf32> to vector<8x128xf32>
    %c0_13 = arith.constant 0 : index
    %c0_14 = arith.constant 0 : index
    %c0_15 = arith.constant 0 : index
    %13 = vector.load %arg2[%c0_13, %c0_14, %c0_15] : memref<1x8x128xf32, #tpu.memory_space<vmem>>, vector<1x8x128xf32>
    %14 = vector.shape_cast %13 : vector<1x8x128xf32> to vector<8x128xf32>
    %c0_i32 = arith.constant 0 : i32
    %15 = arith.index_cast %c0_i32 : i32 to index
    %c0_16 = arith.constant 0 : index
    %c0_17 = arith.constant 0 : index
    %16 = vector.load %arg11[%15, %c0_16, %c0_17] : memref<8x8x384xf32, #tpu.memory_space<vmem>>, vector<1x8x384xf32>
    %17 = vector.shape_cast %16 : vector<1x8x384xf32> to vector<8x384xf32>
    %18 = arith.truncf %14 : vector<8x128xf32> to vector<8x128xbf16>
    %cst_18 = arith.constant dense<0.000000e+00> : vector<8x384xf32>
    %19 = tpu.matmul %18, %9, %cst_18 {dimension_numbers = #tpu.dot_dimension_numbers<[1], [0], [0], [1], [0, 0, 1, 1], [], []>} : vector<8x128xbf16>, vector<128x384xbf16>, vector<8x384xf32> -> vector<8x384xf32>
    %20 = vector.extract_strided_slice %17 {offsets = [0, 0], sizes = [8, 128], strides = [1, 1]} : vector<8x384xf32> to vector<8x128xf32>
    %21 = vector.extract_strided_slice %19 {offsets = [0, 0], sizes = [8, 128], strides = [1, 1]} : vector<8x384xf32> to vector<8x128xf32>
    %22 = arith.addf %20, %21 : vector<8x128xf32>
    %23 = arith.negf %22 : vector<8x128xf32>
    %24 = math.exp %23 : vector<8x128xf32>
    %cst_19 = arith.constant 1.000000e+00 : f32
    %25 = vector.broadcast %cst_19 : f32 to vector<8x128xf32>
    %26 = arith.addf %25, %24 : vector<8x128xf32>
    %27 = arith.divf %25, %26 : vector<8x128xf32>
    %28 = vector.extract_strided_slice %17 {offsets = [0, 128], sizes = [8, 128], strides = [1, 1]} : vector<8x384xf32> to vector<8x128xf32>
    %29 = vector.extract_strided_slice %19 {offsets = [0, 128], sizes = [8, 128], strides = [1, 1]} : vector<8x384xf32> to vector<8x128xf32>
    %30 = arith.addf %28, %29 : vector<8x128xf32>
    %31 = arith.negf %30 : vector<8x128xf32>
    %32 = math.exp %31 : vector<8x128xf32>
    %cst_20 = arith.constant 1.000000e+00 : f32
    %33 = vector.broadcast %cst_20 : f32 to vector<8x128xf32>
    %34 = arith.addf %33, %32 : vector<8x128xf32>
    %35 = arith.divf %33, %34 : vector<8x128xf32>
    %36 = vector.extract_strided_slice %17 {offsets = [0, 256], sizes = [8, 128], strides = [1, 1]} : vector<8x384xf32> to vector<8x128xf32>
    %37 = vector.extract_strided_slice %19 {offsets = [0, 256], sizes = [8, 128], strides = [1, 1]} : vector<8x384xf32> to vector<8x128xf32>
    %38 = arith.addf %37, %12 : vector<8x128xf32>
    %39 = arith.mulf %27, %38 : vector<8x128xf32>
    %40 = arith.addf %36, %39 : vector<8x128xf32>
    %41 = math.tanh %40 : vector<8x128xf32>
    %cst_21 = arith.constant 1.000000e+00 : f32
    %42 = vector.broadcast %cst_21 : f32 to vector<8x128xf32>
    %43 = arith.subf %42, %35 : vector<8x128xf32>
    %44 = arith.mulf %43, %41 : vector<8x128xf32>
    %45 = arith.mulf %35, %14 : vector<8x128xf32>
    %46 = arith.addf %44, %45 : vector<8x128xf32>
    %47 = arith.index_cast %c0_i32 : i32 to index
    %c0_22 = arith.constant 0 : index
    %c0_23 = arith.constant 0 : index
    %48 = vector.load %arg12[%47, %c0_22, %c0_23] : memref<8x8x128xf32, #tpu.memory_space<vmem>>, vector<1x8x128xf32>
    %49 = vector.shape_cast %48 : vector<1x8x128xf32> to vector<8x128xf32>
    %50 = vector.shape_cast %46 : vector<8x128xf32> to vector<1x8x128xf32>
    tpu.vector_store %arg12[%47, %c0_22, %c0_23], %50 {strides = array<i32>} : memref<8x8x128xf32, #tpu.memory_space<vmem>>, vector<1x8x128xf32>,
    %c1_i32 = arith.constant 1 : i32
    %51 = arith.index_cast %c1_i32 : i32 to index
    %c0_24 = arith.constant 0 : index
    %c0_25 = arith.constant 0 : index
    %52 = vector.load %arg11[%51, %c0_24, %c0_25] : memref<8x8x384xf32, #tpu.memory_space<vmem>>, vector<1x8x384xf32>
    %53 = vector.shape_cast %52 : vector<1x8x384xf32> to vector<8x384xf32>
    %54 = arith.truncf %46 : vector<8x128xf32> to vector<8x128xbf16>
    %cst_26 = arith.constant dense<0.000000e+00> : vector<8x384xf32>
    %55 = tpu.matmul %54, %9, %cst_26 {dimension_numbers = #tpu.dot_dimension_numbers<[1], [0], [0], [1], [0, 0, 1, 1], [], []>} : vector<8x128xbf16>, vector<128x384xbf16>, vector<8x384xf32> -> vector<8x384xf32>
    %56 = vector.extract_strided_slice %53 {offsets = [0, 0], sizes = [8, 128], strides = [1, 1]} : vector<8x384xf32> to vector<8x128xf32>
    %57 = vector.extract_strided_slice %55 {offsets = [0, 0], sizes = [8, 128], strides = [1, 1]} : vector<8x384xf32> to vector<8x128xf32>
    %58 = arith.addf %56, %57 : vector<8x128xf32>
    %59 = arith.negf %58 : vector<8x128xf32>
    %60 = math.exp %59 : vector<8x128xf32>
    %cst_27 = arith.constant 1.000000e+00 : f32
    %61 = vector.broadcast %cst_27 : f32 to vector<8x128xf32>
    %62 = arith.addf %61, %60 : vector<8x128xf32>
    %63 = arith.divf %61, %62 : vector<8x128xf32>
    %64 = vector.extract_strided_slice %53 {offsets = [0, 128], sizes = [8, 128], strides = [1, 1]} : vector<8x384xf32> to vector<8x128xf32>
    %65 = vector.extract_strided_slice %55 {offsets = [0, 128], sizes = [8, 128], strides = [1, 1]} : vector<8x384xf32> to vector<8x128xf32>
    %66 = arith.addf %64, %65 : vector<8x128xf32>
    %67 = arith.negf %66 : vector<8x128xf32>
    %68 = math.exp %67 : vector<8x128xf32>
    %cst_28 = arith.constant 1.000000e+00 : f32
    %69 = vector.broadcast %cst_28 : f32 to vector<8x128xf32>
    %70 = arith.addf %69, %68 : vector<8x128xf32>
    %71 = arith.divf %69, %70 : vector<8x128xf32>
    %72 = vector.extract_strided_slice %53 {offsets = [0, 256], sizes = [8, 128], strides = [1, 1]} : vector<8x384xf32> to vector<8x128xf32>
    %73 = vector.extract_strided_slice %55 {offsets = [0, 256], sizes = [8, 128], strides = [1, 1]} : vector<8x384xf32> to vector<8x128xf32>
    %74 = arith.addf %73, %12 : vector<8x128xf32>
    %75 = arith.mulf %63, %74 : vector<8x128xf32>
    %76 = arith.addf %72, %75 : vector<8x128xf32>
    %77 = math.tanh %76 : vector<8x128xf32>
    %cst_29 = arith.constant 1.000000e+00 : f32
    %78 = vector.broadcast %cst_29 : f32 to vector<8x128xf32>
    %79 = arith.subf %78, %71 : vector<8x128xf32>
    %80 = arith.mulf %79, %77 : vector<8x128xf32>
    %81 = arith.mulf %71, %46 : vector<8x128xf32>
    %82 = arith.addf %80, %81 : vector<8x128xf32>
    %83 = arith.index_cast %c1_i32 : i32 to index
    %c0_30 = arith.constant 0 : index
    %c0_31 = arith.constant 0 : index
    %84 = vector.load %arg12[%83, %c0_30, %c0_31] : memref<8x8x128xf32, #tpu.memory_space<vmem>>, vector<1x8x128xf32>
    %85 = vector.shape_cast %84 : vector<1x8x128xf32> to vector<8x128xf32>
    %86 = vector.shape_cast %82 : vector<8x128xf32> to vector<1x8x128xf32>
    tpu.vector_store %arg12[%83, %c0_30, %c0_31], %86 {strides = array<i32>} : memref<8x8x128xf32, #tpu.memory_space<vmem>>, vector<1x8x128xf32>,
    %c2_i32 = arith.constant 2 : i32
    %87 = arith.index_cast %c2_i32 : i32 to index
    %c0_32 = arith.constant 0 : index
    %c0_33 = arith.constant 0 : index
    %88 = vector.load %arg11[%87, %c0_32, %c0_33] : memref<8x8x384xf32, #tpu.memory_space<vmem>>, vector<1x8x384xf32>
    %89 = vector.shape_cast %88 : vector<1x8x384xf32> to vector<8x384xf32>
    %90 = arith.truncf %82 : vector<8x128xf32> to vector<8x128xbf16>
    %cst_34 = arith.constant dense<0.000000e+00> : vector<8x384xf32>
    %91 = tpu.matmul %90, %9, %cst_34 {dimension_numbers = #tpu.dot_dimension_numbers<[1], [0], [0], [1], [0, 0, 1, 1], [], []>} : vector<8x128xbf16>, vector<128x384xbf16>, vector<8x384xf32> -> vector<8x384xf32>
    %92 = vector.extract_strided_slice %89 {offsets = [0, 0], sizes = [8, 128], strides = [1, 1]} : vector<8x384xf32> to vector<8x128xf32>
    %93 = vector.extract_strided_slice %91 {offsets = [0, 0], sizes = [8, 128], strides = [1, 1]} : vector<8x384xf32> to vector<8x128xf32>
    %94 = arith.addf %92, %93 : vector<8x128xf32>
    %95 = arith.negf %94 : vector<8x128xf32>
    %96 = math.exp %95 : vector<8x128xf32>
    %cst_35 = arith.constant 1.000000e+00 : f32
    %97 = vector.broadcast %cst_35 : f32 to vector<8x128xf32>
    %98 = arith.addf %97, %96 : vector<8x128xf32>
    %99 = arith.divf %97, %98 : vector<8x128xf32>
    %100 = vector.extract_strided_slice %89 {offsets = [0, 128], sizes = [8, 128], strides = [1, 1]} : vector<8x384xf32> to vector<8x128xf32>
    %101 = vector.extract_strided_slice %91 {offsets = [0, 128], sizes = [8, 128], strides = [1, 1]} : vector<8x384xf32> to vector<8x128xf32>
    %102 = arith.addf %100, %101 : vector<8x128xf32>
    %103 = arith.negf %102 : vector<8x128xf32>
    %104 = math.exp %103 : vector<8x128xf32>
    %cst_36 = arith.constant 1.000000e+00 : f32
    %105 = vector.broadcast %cst_36 : f32 to vector<8x128xf32>
    %106 = arith.addf %105, %104 : vector<8x128xf32>
    %107 = arith.divf %105, %106 : vector<8x128xf32>
    %108 = vector.extract_strided_slice %89 {offsets = [0, 256], sizes = [8, 128], strides = [1, 1]} : vector<8x384xf32> to vector<8x128xf32>
    %109 = vector.extract_strided_slice %91 {offsets = [0, 256], sizes = [8, 128], strides = [1, 1]} : vector<8x384xf32> to vector<8x128xf32>
    %110 = arith.addf %109, %12 : vector<8x128xf32>
    %111 = arith.mulf %99, %110 : vector<8x128xf32>
    %112 = arith.addf %108, %111 : vector<8x128xf32>
    %113 = math.tanh %112 : vector<8x128xf32>
    %cst_37 = arith.constant 1.000000e+00 : f32
    %114 = vector.broadcast %cst_37 : f32 to vector<8x128xf32>
    %115 = arith.subf %114, %107 : vector<8x128xf32>
    %116 = arith.mulf %115, %113 : vector<8x128xf32>
    %117 = arith.mulf %107, %82 : vector<8x128xf32>
    %118 = arith.addf %116, %117 : vector<8x128xf32>
    %119 = arith.index_cast %c2_i32 : i32 to index
    %c0_38 = arith.constant 0 : index
    %c0_39 = arith.constant 0 : index
    %120 = vector.load %arg12[%119, %c0_38, %c0_39] : memref<8x8x128xf32, #tpu.memory_space<vmem>>, vector<1x8x128xf32>
    %121 = vector.shape_cast %120 : vector<1x8x128xf32> to vector<8x128xf32>
    %122 = vector.shape_cast %118 : vector<8x128xf32> to vector<1x8x128xf32>
    tpu.vector_store %arg12[%119, %c0_38, %c0_39], %122 {strides = array<i32>} : memref<8x8x128xf32, #tpu.memory_space<vmem>>, vector<1x8x128xf32>,
    %c3_i32 = arith.constant 3 : i32
    %123 = arith.index_cast %c3_i32 : i32 to index
    %c0_40 = arith.constant 0 : index
    %c0_41 = arith.constant 0 : index
    %124 = vector.load %arg11[%123, %c0_40, %c0_41] : memref<8x8x384xf32, #tpu.memory_space<vmem>>, vector<1x8x384xf32>
    %125 = vector.shape_cast %124 : vector<1x8x384xf32> to vector<8x384xf32>
    %126 = arith.truncf %118 : vector<8x128xf32> to vector<8x128xbf16>
    %cst_42 = arith.constant dense<0.000000e+00> : vector<8x384xf32>
    %127 = tpu.matmul %126, %9, %cst_42 {dimension_numbers = #tpu.dot_dimension_numbers<[1], [0], [0], [1], [0, 0, 1, 1], [], []>} : vector<8x128xbf16>, vector<128x384xbf16>, vector<8x384xf32> -> vector<8x384xf32>
    %128 = vector.extract_strided_slice %125 {offsets = [0, 0], sizes = [8, 128], strides = [1, 1]} : vector<8x384xf32> to vector<8x128xf32>
    %129 = vector.extract_strided_slice %127 {offsets = [0, 0], sizes = [8, 128], strides = [1, 1]} : vector<8x384xf32> to vector<8x128xf32>
    %130 = arith.addf %128, %129 : vector<8x128xf32>
    %131 = arith.negf %130 : vector<8x128xf32>
    %132 = math.exp %131 : vector<8x128xf32>
    %cst_43 = arith.constant 1.000000e+00 : f32
    %133 = vector.broadcast %cst_43 : f32 to vector<8x128xf32>
    %134 = arith.addf %133, %132 : vector<8x128xf32>
    %135 = arith.divf %133, %134 : vector<8x128xf32>
    %136 = vector.extract_strided_slice %125 {offsets = [0, 128], sizes = [8, 128], strides = [1, 1]} : vector<8x384xf32> to vector<8x128xf32>
    %137 = vector.extract_strided_slice %127 {offsets = [0, 128], sizes = [8, 128], strides = [1, 1]} : vector<8x384xf32> to vector<8x128xf32>
    %138 = arith.addf %136, %137 : vector<8x128xf32>
    %139 = arith.negf %138 : vector<8x128xf32>
    %140 = math.exp %139 : vector<8x128xf32>
    %cst_44 = arith.constant 1.000000e+00 : f32
    %141 = vector.broadcast %cst_44 : f32 to vector<8x128xf32>
    %142 = arith.addf %141, %140 : vector<8x128xf32>
    %143 = arith.divf %141, %142 : vector<8x128xf32>
    %144 = vector.extract_strided_slice %125 {offsets = [0, 256], sizes = [8, 128], strides = [1, 1]} : vector<8x384xf32> to vector<8x128xf32>
    %145 = vector.extract_strided_slice %127 {offsets = [0, 256], sizes = [8, 128], strides = [1, 1]} : vector<8x384xf32> to vector<8x128xf32>
    %146 = arith.addf %145, %12 : vector<8x128xf32>
    %147 = arith.mulf %135, %146 : vector<8x128xf32>
    %148 = arith.addf %144, %147 : vector<8x128xf32>
    %149 = math.tanh %148 : vector<8x128xf32>
    %cst_45 = arith.constant 1.000000e+00 : f32
    %150 = vector.broadcast %cst_45 : f32 to vector<8x128xf32>
    %151 = arith.subf %150, %143 : vector<8x128xf32>
    %152 = arith.mulf %151, %149 : vector<8x128xf32>
    %153 = arith.mulf %143, %118 : vector<8x128xf32>
    %154 = arith.addf %152, %153 : vector<8x128xf32>
    %155 = arith.index_cast %c3_i32 : i32 to index
    %c0_46 = arith.constant 0 : index
    %c0_47 = arith.constant 0 : index
    %156 = vector.load %arg12[%155, %c0_46, %c0_47] : memref<8x8x128xf32, #tpu.memory_space<vmem>>, vector<1x8x128xf32>
    %157 = vector.shape_cast %156 : vector<1x8x128xf32> to vector<8x128xf32>
    %158 = vector.shape_cast %154 : vector<8x128xf32> to vector<1x8x128xf32>
    tpu.vector_store %arg12[%155, %c0_46, %c0_47], %158 {strides = array<i32>} : memref<8x8x128xf32, #tpu.memory_space<vmem>>, vector<1x8x128xf32>,
    %c4_i32 = arith.constant 4 : i32
    %159 = arith.index_cast %c4_i32 : i32 to index
    %c0_48 = arith.constant 0 : index
    %c0_49 = arith.constant 0 : index
    %160 = vector.load %arg11[%159, %c0_48, %c0_49] : memref<8x8x384xf32, #tpu.memory_space<vmem>>, vector<1x8x384xf32>
    %161 = vector.shape_cast %160 : vector<1x8x384xf32> to vector<8x384xf32>
    %162 = arith.truncf %154 : vector<8x128xf32> to vector<8x128xbf16>
    %cst_50 = arith.constant dense<0.000000e+00> : vector<8x384xf32>
    %163 = tpu.matmul %162, %9, %cst_50 {dimension_numbers = #tpu.dot_dimension_numbers<[1], [0], [0], [1], [0, 0, 1, 1], [], []>} : vector<8x128xbf16>, vector<128x384xbf16>, vector<8x384xf32> -> vector<8x384xf32>
    %164 = vector.extract_strided_slice %161 {offsets = [0, 0], sizes = [8, 128], strides = [1, 1]} : vector<8x384xf32> to vector<8x128xf32>
    %165 = vector.extract_strided_slice %163 {offsets = [0, 0], sizes = [8, 128], strides = [1, 1]} : vector<8x384xf32> to vector<8x128xf32>
    %166 = arith.addf %164, %165 : vector<8x128xf32>
    %167 = arith.negf %166 : vector<8x128xf32>
    %168 = math.exp %167 : vector<8x128xf32>
    %cst_51 = arith.constant 1.000000e+00 : f32
    %169 = vector.broadcast %cst_51 : f32 to vector<8x128xf32>
    %170 = arith.addf %169, %168 : vector<8x128xf32>
    %171 = arith.divf %169, %170 : vector<8x128xf32>
    %172 = vector.extract_strided_slice %161 {offsets = [0, 128], sizes = [8, 128], strides = [1, 1]} : vector<8x384xf32> to vector<8x128xf32>
    %173 = vector.extract_strided_slice %163 {offsets = [0, 128], sizes = [8, 128], strides = [1, 1]} : vector<8x384xf32> to vector<8x128xf32>
    %174 = arith.addf %172, %173 : vector<8x128xf32>
    %175 = arith.negf %174 : vector<8x128xf32>
    %176 = math.exp %175 : vector<8x128xf32>
    %cst_52 = arith.constant 1.000000e+00 : f32
    %177 = vector.broadcast %cst_52 : f32 to vector<8x128xf32>
    %178 = arith.addf %177, %176 : vector<8x128xf32>
    %179 = arith.divf %177, %178 : vector<8x128xf32>
    %180 = vector.extract_strided_slice %161 {offsets = [0, 256], sizes = [8, 128], strides = [1, 1]} : vector<8x384xf32> to vector<8x128xf32>
    %181 = vector.extract_strided_slice %163 {offsets = [0, 256], sizes = [8, 128], strides = [1, 1]} : vector<8x384xf32> to vector<8x128xf32>
    %182 = arith.addf %181, %12 : vector<8x128xf32>
    %183 = arith.mulf %171, %182 : vector<8x128xf32>
    %184 = arith.addf %180, %183 : vector<8x128xf32>
    %185 = math.tanh %184 : vector<8x128xf32>
    %cst_53 = arith.constant 1.000000e+00 : f32
    %186 = vector.broadcast %cst_53 : f32 to vector<8x128xf32>
    %187 = arith.subf %186, %179 : vector<8x128xf32>
    %188 = arith.mulf %187, %185 : vector<8x128xf32>
    %189 = arith.mulf %179, %154 : vector<8x128xf32>
    %190 = arith.addf %188, %189 : vector<8x128xf32>
    %191 = arith.index_cast %c4_i32 : i32 to index
    %c0_54 = arith.constant 0 : index
    %c0_55 = arith.constant 0 : index
    %192 = vector.load %arg12[%191, %c0_54, %c0_55] : memref<8x8x128xf32, #tpu.memory_space<vmem>>, vector<1x8x128xf32>
    %193 = vector.shape_cast %192 : vector<1x8x128xf32> to vector<8x128xf32>
    %194 = vector.shape_cast %190 : vector<8x128xf32> to vector<1x8x128xf32>
    tpu.vector_store %arg12[%191, %c0_54, %c0_55], %194 {strides = array<i32>} : memref<8x8x128xf32, #tpu.memory_space<vmem>>, vector<1x8x128xf32>,
    %c5_i32 = arith.constant 5 : i32
    %195 = arith.index_cast %c5_i32 : i32 to index
    %c0_56 = arith.constant 0 : index
    %c0_57 = arith.constant 0 : index
    %196 = vector.load %arg11[%195, %c0_56, %c0_57] : memref<8x8x384xf32, #tpu.memory_space<vmem>>, vector<1x8x384xf32>
    %197 = vector.shape_cast %196 : vector<1x8x384xf32> to vector<8x384xf32>
    %198 = arith.truncf %190 : vector<8x128xf32> to vector<8x128xbf16>
    %cst_58 = arith.constant dense<0.000000e+00> : vector<8x384xf32>
    %199 = tpu.matmul %198, %9, %cst_58 {dimension_numbers = #tpu.dot_dimension_numbers<[1], [0], [0], [1], [0, 0, 1, 1], [], []>} : vector<8x128xbf16>, vector<128x384xbf16>, vector<8x384xf32> -> vector<8x384xf32>
    %200 = vector.extract_strided_slice %197 {offsets = [0, 0], sizes = [8, 128], strides = [1, 1]} : vector<8x384xf32> to vector<8x128xf32>
    %201 = vector.extract_strided_slice %199 {offsets = [0, 0], sizes = [8, 128], strides = [1, 1]} : vector<8x384xf32> to vector<8x128xf32>
    %202 = arith.addf %200, %201 : vector<8x128xf32>
    %203 = arith.negf %202 : vector<8x128xf32>
    %204 = math.exp %203 : vector<8x128xf32>
    %cst_59 = arith.constant 1.000000e+00 : f32
    %205 = vector.broadcast %cst_59 : f32 to vector<8x128xf32>
    %206 = arith.addf %205, %204 : vector<8x128xf32>
    %207 = arith.divf %205, %206 : vector<8x128xf32>
    %208 = vector.extract_strided_slice %197 {offsets = [0, 128], sizes = [8, 128], strides = [1, 1]} : vector<8x384xf32> to vector<8x128xf32>
    %209 = vector.extract_strided_slice %199 {offsets = [0, 128], sizes = [8, 128], strides = [1, 1]} : vector<8x384xf32> to vector<8x128xf32>
    %210 = arith.addf %208, %209 : vector<8x128xf32>
    %211 = arith.negf %210 : vector<8x128xf32>
    %212 = math.exp %211 : vector<8x128xf32>
    %cst_60 = arith.constant 1.000000e+00 : f32
    %213 = vector.broadcast %cst_60 : f32 to vector<8x128xf32>
    %214 = arith.addf %213, %212 : vector<8x128xf32>
    %215 = arith.divf %213, %214 : vector<8x128xf32>
    %216 = vector.extract_strided_slice %197 {offsets = [0, 256], sizes = [8, 128], strides = [1, 1]} : vector<8x384xf32> to vector<8x128xf32>
    %217 = vector.extract_strided_slice %199 {offsets = [0, 256], sizes = [8, 128], strides = [1, 1]} : vector<8x384xf32> to vector<8x128xf32>
    %218 = arith.addf %217, %12 : vector<8x128xf32>
    %219 = arith.mulf %207, %218 : vector<8x128xf32>
    %220 = arith.addf %216, %219 : vector<8x128xf32>
    %221 = math.tanh %220 : vector<8x128xf32>
    %cst_61 = arith.constant 1.000000e+00 : f32
    %222 = vector.broadcast %cst_61 : f32 to vector<8x128xf32>
    %223 = arith.subf %222, %215 : vector<8x128xf32>
    %224 = arith.mulf %223, %221 : vector<8x128xf32>
    %225 = arith.mulf %215, %190 : vector<8x128xf32>
    %226 = arith.addf %224, %225 : vector<8x128xf32>
    %227 = arith.index_cast %c5_i32 : i32 to index
    %c0_62 = arith.constant 0 : index
    %c0_63 = arith.constant 0 : index
    %228 = vector.load %arg12[%227, %c0_62, %c0_63] : memref<8x8x128xf32, #tpu.memory_space<vmem>>, vector<1x8x128xf32>
    %229 = vector.shape_cast %228 : vector<1x8x128xf32> to vector<8x128xf32>
    %230 = vector.shape_cast %226 : vector<8x128xf32> to vector<1x8x128xf32>
    tpu.vector_store %arg12[%227, %c0_62, %c0_63], %230 {strides = array<i32>} : memref<8x8x128xf32, #tpu.memory_space<vmem>>, vector<1x8x128xf32>,
    %c6_i32 = arith.constant 6 : i32
    %231 = arith.index_cast %c6_i32 : i32 to index
    %c0_64 = arith.constant 0 : index
    %c0_65 = arith.constant 0 : index
    %232 = vector.load %arg11[%231, %c0_64, %c0_65] : memref<8x8x384xf32, #tpu.memory_space<vmem>>, vector<1x8x384xf32>
    %233 = vector.shape_cast %232 : vector<1x8x384xf32> to vector<8x384xf32>
    %234 = arith.truncf %226 : vector<8x128xf32> to vector<8x128xbf16>
    %cst_66 = arith.constant dense<0.000000e+00> : vector<8x384xf32>
    %235 = tpu.matmul %234, %9, %cst_66 {dimension_numbers = #tpu.dot_dimension_numbers<[1], [0], [0], [1], [0, 0, 1, 1], [], []>} : vector<8x128xbf16>, vector<128x384xbf16>, vector<8x384xf32> -> vector<8x384xf32>
    %236 = vector.extract_strided_slice %233 {offsets = [0, 0], sizes = [8, 128], strides = [1, 1]} : vector<8x384xf32> to vector<8x128xf32>
    %237 = vector.extract_strided_slice %235 {offsets = [0, 0], sizes = [8, 128], strides = [1, 1]} : vector<8x384xf32> to vector<8x128xf32>
    %238 = arith.addf %236, %237 : vector<8x128xf32>
    %239 = arith.negf %238 : vector<8x128xf32>
    %240 = math.exp %239 : vector<8x128xf32>
    %cst_67 = arith.constant 1.000000e+00 : f32
    %241 = vector.broadcast %cst_67 : f32 to vector<8x128xf32>
    %242 = arith.addf %241, %240 : vector<8x128xf32>
    %243 = arith.divf %241, %242 : vector<8x128xf32>
    %244 = vector.extract_strided_slice %233 {offsets = [0, 128], sizes = [8, 128], strides = [1, 1]} : vector<8x384xf32> to vector<8x128xf32>
    %245 = vector.extract_strided_slice %235 {offsets = [0, 128], sizes = [8, 128], strides = [1, 1]} : vector<8x384xf32> to vector<8x128xf32>
    %246 = arith.addf %244, %245 : vector<8x128xf32>
    %247 = arith.negf %246 : vector<8x128xf32>
    %248 = math.exp %247 : vector<8x128xf32>
    %cst_68 = arith.constant 1.000000e+00 : f32
    %249 = vector.broadcast %cst_68 : f32 to vector<8x128xf32>
    %250 = arith.addf %249, %248 : vector<8x128xf32>
    %251 = arith.divf %249, %250 : vector<8x128xf32>
    %252 = vector.extract_strided_slice %233 {offsets = [0, 256], sizes = [8, 128], strides = [1, 1]} : vector<8x384xf32> to vector<8x128xf32>
    %253 = vector.extract_strided_slice %235 {offsets = [0, 256], sizes = [8, 128], strides = [1, 1]} : vector<8x384xf32> to vector<8x128xf32>
    %254 = arith.addf %253, %12 : vector<8x128xf32>
    %255 = arith.mulf %243, %254 : vector<8x128xf32>
    %256 = arith.addf %252, %255 : vector<8x128xf32>
    %257 = math.tanh %256 : vector<8x128xf32>
    %cst_69 = arith.constant 1.000000e+00 : f32
    %258 = vector.broadcast %cst_69 : f32 to vector<8x128xf32>
    %259 = arith.subf %258, %251 : vector<8x128xf32>
    %260 = arith.mulf %259, %257 : vector<8x128xf32>
    %261 = arith.mulf %251, %226 : vector<8x128xf32>
    %262 = arith.addf %260, %261 : vector<8x128xf32>
    %263 = arith.index_cast %c6_i32 : i32 to index
    %c0_70 = arith.constant 0 : index
    %c0_71 = arith.constant 0 : index
    %264 = vector.load %arg12[%263, %c0_70, %c0_71] : memref<8x8x128xf32, #tpu.memory_space<vmem>>, vector<1x8x128xf32>
    %265 = vector.shape_cast %264 : vector<1x8x128xf32> to vector<8x128xf32>
    %266 = vector.shape_cast %262 : vector<8x128xf32> to vector<1x8x128xf32>
    tpu.vector_store %arg12[%263, %c0_70, %c0_71], %266 {strides = array<i32>} : memref<8x8x128xf32, #tpu.memory_space<vmem>>, vector<1x8x128xf32>,
    %c7_i32 = arith.constant 7 : i32
    %267 = arith.index_cast %c7_i32 : i32 to index
    %c0_72 = arith.constant 0 : index
    %c0_73 = arith.constant 0 : index
    %268 = vector.load %arg11[%267, %c0_72, %c0_73] : memref<8x8x384xf32, #tpu.memory_space<vmem>>, vector<1x8x384xf32>
    %269 = vector.shape_cast %268 : vector<1x8x384xf32> to vector<8x384xf32>
    %270 = arith.truncf %262 : vector<8x128xf32> to vector<8x128xbf16>
    %cst_74 = arith.constant dense<0.000000e+00> : vector<8x384xf32>
    %271 = tpu.matmul %270, %9, %cst_74 {dimension_numbers = #tpu.dot_dimension_numbers<[1], [0], [0], [1], [0, 0, 1, 1], [], []>} : vector<8x128xbf16>, vector<128x384xbf16>, vector<8x384xf32> -> vector<8x384xf32>
    %272 = vector.extract_strided_slice %269 {offsets = [0, 0], sizes = [8, 128], strides = [1, 1]} : vector<8x384xf32> to vector<8x128xf32>
    %273 = vector.extract_strided_slice %271 {offsets = [0, 0], sizes = [8, 128], strides = [1, 1]} : vector<8x384xf32> to vector<8x128xf32>
    %274 = arith.addf %272, %273 : vector<8x128xf32>
    %275 = arith.negf %274 : vector<8x128xf32>
    %276 = math.exp %275 : vector<8x128xf32>
    %cst_75 = arith.constant 1.000000e+00 : f32
    %277 = vector.broadcast %cst_75 : f32 to vector<8x128xf32>
    %278 = arith.addf %277, %276 : vector<8x128xf32>
    %279 = arith.divf %277, %278 : vector<8x128xf32>
    %280 = vector.extract_strided_slice %269 {offsets = [0, 128], sizes = [8, 128], strides = [1, 1]} : vector<8x384xf32> to vector<8x128xf32>
    %281 = vector.extract_strided_slice %271 {offsets = [0, 128], sizes = [8, 128], strides = [1, 1]} : vector<8x384xf32> to vector<8x128xf32>
    %282 = arith.addf %280, %281 : vector<8x128xf32>
    %283 = arith.negf %282 : vector<8x128xf32>
    %284 = math.exp %283 : vector<8x128xf32>
    %cst_76 = arith.constant 1.000000e+00 : f32
    %285 = vector.broadcast %cst_76 : f32 to vector<8x128xf32>
    %286 = arith.addf %285, %284 : vector<8x128xf32>
    %287 = arith.divf %285, %286 : vector<8x128xf32>
    %288 = vector.extract_strided_slice %269 {offsets = [0, 256], sizes = [8, 128], strides = [1, 1]} : vector<8x384xf32> to vector<8x128xf32>
    %289 = vector.extract_strided_slice %271 {offsets = [0, 256], sizes = [8, 128], strides = [1, 1]} : vector<8x384xf32> to vector<8x128xf32>
    %290 = arith.addf %289, %12 : vector<8x128xf32>
    %291 = arith.mulf %279, %290 : vector<8x128xf32>
    %292 = arith.addf %288, %291 : vector<8x128xf32>
    %293 = math.tanh %292 : vector<8x128xf32>
    %cst_77 = arith.constant 1.000000e+00 : f32
    %294 = vector.broadcast %cst_77 : f32 to vector<8x128xf32>
    %295 = arith.subf %294, %287 : vector<8x128xf32>
    %296 = arith.mulf %295, %293 : vector<8x128xf32>
    %297 = arith.mulf %287, %262 : vector<8x128xf32>
    %298 = arith.addf %296, %297 : vector<8x128xf32>
    %299 = arith.index_cast %c7_i32 : i32 to index
    %c0_78 = arith.constant 0 : index
    %c0_79 = arith.constant 0 : index
    %300 = vector.load %arg12[%299, %c0_78, %c0_79] : memref<8x8x128xf32, #tpu.memory_space<vmem>>, vector<1x8x128xf32>
    %301 = vector.shape_cast %300 : vector<1x8x128xf32> to vector<8x128xf32>
    %302 = vector.shape_cast %298 : vector<8x128xf32> to vector<1x8x128xf32>
    tpu.vector_store %arg12[%299, %c0_78, %c0_79], %302 {strides = array<i32>} : memref<8x8x128xf32, #tpu.memory_space<vmem>>, vector<1x8x128xf32>,
    %c8_i32 = arith.constant 8 : i32
    %c0_80 = arith.constant 0 : index
    %c0_81 = arith.constant 0 : index
    %c0_82 = arith.constant 0 : index
    %303 = vector.load %arg10[%c0_80, %c0_81, %c0_82] : memref<1x8x128xf32, #tpu.memory_space<vmem>>, vector<1x8x128xf32>
    %304 = vector.shape_cast %303 : vector<1x8x128xf32> to vector<8x128xf32>
    %305 = vector.shape_cast %298 : vector<8x128xf32> to vector<1x8x128xf32>
    tpu.vector_store %arg10[%c0_80, %c0_81, %c0_82], %305 {strides = array<i32>} : memref<1x8x128xf32, #tpu.memory_space<vmem>>, vector<1x8x128xf32>,
    %c0_83 = arith.constant 0 : index
    %c0_84 = arith.constant 0 : index
    %c0_85 = arith.constant 0 : index
    %306 = vector.load %arg12[%c0_83, %c0_84, %c0_85] : memref<8x8x128xf32, #tpu.memory_space<vmem>>, vector<8x8x128xf32>
    %307 = vector.shape_cast %306 : vector<8x8x128xf32> to vector<64x128xf32>
    %308 = arith.truncf %307 : vector<64x128xf32> to vector<64x128xbf16>
    %c0_86 = arith.constant 0 : index
    %c0_87 = arith.constant 0 : index
    %309 = vector.load %arg7[%c0_86, %c0_87] : memref<128x128xbf16, #tpu.memory_space<vmem>>, vector<128x128xbf16>
    %cst_88 = arith.constant dense<0.000000e+00> : vector<64x128xf32>
    %310 = tpu.matmul %308, %309, %cst_88 {dimension_numbers = #tpu.dot_dimension_numbers<[1], [0], [0], [1], [0, 0, 1, 1], [], []>} : vector<64x128xbf16>, vector<128x128xbf16>, vector<64x128xf32> -> vector<64x128xf32>
    %c0_89 = arith.constant 0 : index
    %c0_90 = arith.constant 0 : index
    %311 = vector.load %arg8[%c0_89, %c0_90] : memref<1x128xf32, #tpu.memory_space<vmem>>, vector<1x128xf32>
    %312 = vector.broadcast %311 : vector<1x128xf32> to vector<64x128xf32>
    %313 = arith.addf %310, %312 : vector<64x128xf32>
    %c0_91 = arith.constant 0 : index
    %c0_92 = arith.constant 0 : index
    %314 = vector.load %arg9[%c0_91, %c0_92] : memref<64x128xf32, #tpu.memory_space<vmem>>, vector<64x128xf32>
    tpu.vector_store %arg9[%c0_91, %c0_92], %313 {strides = array<i32>} : memref<64x128xf32, #tpu.memory_space<vmem>>, vector<64x128xf32>,
    return
  }
  func.func @transform_0(%arg0: i32) -> (i32, i32, i32) {
    %c0_i32 = arith.constant 0 : i32
    %c0_i32_0 = arith.constant 0 : i32
    %c0_i32_1 = arith.constant 0 : i32
    %c0_i32_2 = arith.constant 0 : i32
    return %c0_i32, %c0_i32_0, %c0_i32_1 : i32, i32, i32
  }
  func.func @transform_1(%arg0: i32) -> (i32, i32, i32) {
    %c0_i32 = arith.constant 0 : i32
    %c0_i32_0 = arith.constant 0 : i32
    %c0_i32_1 = arith.constant 0 : i32
    %c0_i32_2 = arith.constant 0 : i32
    return %c0_i32, %c0_i32_0, %c0_i32_1 : i32, i32, i32
  }
  func.func @transform_2(%arg0: i32) -> (i32, i32) {
    %c0_i32 = arith.constant 0 : i32
    %c0_i32_0 = arith.constant 0 : i32
    %c0_i32_1 = arith.constant 0 : i32
    return %c0_i32, %c0_i32_0 : i32, i32
  }
  func.func @transform_3(%arg0: i32) -> (i32, i32) {
    %c0_i32 = arith.constant 0 : i32
    %c0_i32_0 = arith.constant 0 : i32
    %c0_i32_1 = arith.constant 0 : i32
    return %c0_i32, %c0_i32_0 : i32, i32
  }
  func.func @transform_4(%arg0: i32) -> (i32, i32) {
    %c0_i32 = arith.constant 0 : i32
    %c0_i32_0 = arith.constant 0 : i32
    %c0_i32_1 = arith.constant 0 : i32
    return %c0_i32, %c0_i32_0 : i32, i32
  }
  func.func @transform_5(%arg0: i32) -> (i32, i32) {
    %c0_i32 = arith.constant 0 : i32
    %c0_i32_0 = arith.constant 0 : i32
    %c0_i32_1 = arith.constant 0 : i32
    return %c0_i32, %c0_i32_0 : i32, i32
  }
  func.func @transform_6(%arg0: i32) -> (i32, i32) {
    %c0_i32 = arith.constant 0 : i32
    %c0_i32_0 = arith.constant 0 : i32
    %c0_i32_1 = arith.constant 0 : i32
    return %c0_i32, %c0_i32_0 : i32, i32
  }
  func.func @transform_7(%arg0: i32) -> (i32, i32) {
    %c0_i32 = arith.constant 0 : i32
    %c0_i32_0 = arith.constant 0 : i32
    %c0_i32_1 = arith.constant 0 : i32
    return %c0_i32, %c0_i32_0 : i32, i32
  }
  func.func @transform_8(%arg0: i32) -> (i32, i32) {
    %c0_i32 = arith.constant 0 : i32
    %c0_i32_0 = arith.constant 0 : i32
    %c0_i32_1 = arith.constant 0 : i32
    return %c0_i32, %c0_i32_0 : i32, i32
  }
  func.func @transform_9(%arg0: i32) -> (i32, i32, i32) {
    %c0_i32 = arith.constant 0 : i32
    %c0_i32_0 = arith.constant 0 : i32
    %c0_i32_1 = arith.constant 0 : i32
    %c0_i32_2 = arith.constant 0 : i32
    return %c0_i32, %c0_i32_0, %c0_i32_1 : i32, i32, i32
  }
}

</mosaic_0001>

<llo_original>
// kernel: state_tracker_gru_forward.1
$region0: #{state_tracker_gru_forward.1}
  #allocation0 [shape = 'u32[]', space=smem, size = 0x4, offset = 0x4, fixed_abs, tag = 'smem constant byte address 0x4 - core index']
  #allocation1 [shape = 'u32[144,128]{1,0:T(1,128)}', space=vmem, size = 0x12000, scoped, tag = 'internal scratch']
  #allocation2 [shape = 'f32[8,8,384]{2,1,0:T(8,128)}', space=vmem, size = 0x18000, scoped, tag = 'scratch operand']
  #allocation3 [shape = 'f32[8,8,128]{2,1,0:T(8,128)}', space=vmem, size = 0x8000, scoped, tag = 'scratch operand']
  %s0 = inlined_call_operand.vmem [shape: bf16[8,8,32], index: 0, kind: input, shape index: {}]
  %s1 = inlined_call_operand.vmem [shape: f32[1,8,128], index: 1, kind: input, shape index: {}]
  %s2 = inlined_call_operand.hbm [shape: bf16[32,384], index: 2, kind: input, shape index: {}]
  %s3 = inlined_call_operand.hbm [shape: bf16[128,384], index: 3, kind: input, shape index: {}]
  %s4 = inlined_call_operand.vmem [shape: f32[1,384], index: 4, kind: input, shape index: {}]
  %s5 = inlined_call_operand.vmem [shape: f32[1,128], index: 5, kind: input, shape index: {}]
  %s6 = inlined_call_operand.vmem [shape: bf16[128,128], index: 6, kind: input, shape index: {}]
  %s7 = inlined_call_operand.vmem [shape: f32[1,128], index: 7, kind: input, shape index: {}]
  %s8 = inlined_call_operand.vmem [shape: f32[64,128], index: 8, kind: output, shape index: {0}]
  %s9 = inlined_call_operand.vmem [shape: f32[1,8,128], index: 9, kind: output, shape index: {1}]
  %10 = xla_tuple %s8, %s9
  %s11 = sld [smem:[#allocation0]]
  $region58: #{state_tracker_gru_forward.1} parent=0
    _
  %s13 = ssub.s32 1, %s11
  %s14 = scalar_select 0, %s13, %s11
  $region1: #{state_tracker_gru_forward.1} parent=0
    #allocation4 [shape = 'u8[24576]{0}', space=vmem, size = 0x6000, scoped, tag = 'input window, operand 2, single buffered']
    #allocation5 [shape = 's32[1]{0}', space=sflag, size = 0x4, scoped, tag = 'scoped memory for state_tracker_gru_forward.1']
    #allocation6 [shape = 'u8[98304]{0}', space=vmem, size = 0x18000, scoped, tag = 'input window, operand 3, single buffered']
    #allocation7 [shape = 's32[1]{0}', space=sflag, size = 0x4, scoped, tag = 'scoped memory for state_tracker_gru_forward.1']
    %15 = vsyncpa [#allocation5], 0
    %16 = vsyncpa [#allocation7], 0
    // Predicated region
    $region2: #{state_tracker_gru_forward.1} parent=1 // pred_check
      _
    $region3: #{state_tracker_gru_forward.1} parent=1 // pred_check_branch
      %18 = sbr.rel (0) target = $region5
    $region4: #{state_tracker_gru_forward.1} parent=1 // pred_region
      _
    $region5: #{state_tracker_gru_forward.1} parent=1 // pred_fallthru
      _
    // Predicated region
    $region6: #{state_tracker_gru_forward.1} parent=1 // pred_check
      _
    $region7: #{state_tracker_gru_forward.1} parent=1 // pred_check_branch
      %20 = sbr.rel (0) target = $region9
    $region8: #{state_tracker_gru_forward.1} parent=1 // pred_region
      _
    $region9: #{state_tracker_gru_forward.1} parent=1 // pred_fallthru
      _
    // Predicated region
    $region10: #{state_tracker_gru_forward.1} parent=1 // pred_check
      _
    $region11: #{state_tracker_gru_forward.1} parent=1 // pred_check_branch
      %22 = sbr.rel (0) target = $region13
    $region12: #{state_tracker_gru_forward.1} parent=1 // pred_region
      %s24 = ssub.s32 768, 768
      %25 = vsyncadd [#allocation5], %s24
      %s26 = sshll.u32 [#allocation4], 4
      %s27 = int_to_ptr.vmem [resolvable:$true] %s26
      %32 = dma.hbm_to_vmem [thread:$0]  %s2, 768, %s27, [#allocation5], 192, 192, 12
    $region13: #{state_tracker_gru_forward.1} parent=1 // pred_fallthru
      _
    // Predicated region
    $region14: #{state_tracker_gru_forward.1} parent=1 // pred_check
      _
    $region15: #{state_tracker_gru_forward.1} parent=1 // pred_check_branch
      %34 = sbr.rel (0) target = $region17
    $region16: #{state_tracker_gru_forward.1} parent=1 // pred_region
      %s36 = ssub.s32 3072, 3072
      %37 = vsyncadd [#allocation7], %s36
      %s38 = sshll.u32 [#allocation6], 4
      %s39 = int_to_ptr.vmem [resolvable:$true] %s38
      %44 = dma.hbm_to_vmem [thread:$0]  %s3, 3072, %s39, [#allocation7], 192, 192, 12
    $region17: #{state_tracker_gru_forward.1} parent=1 // pred_fallthru
      _
    // Predicated region
    $region18: #{state_tracker_gru_forward.1} parent=1 // pred_check
      _
    $region19: #{state_tracker_gru_forward.1} parent=1 // pred_check_branch
      %46 = sbr.rel (0) target = $region21
    $region20: #{state_tracker_gru_forward.1} parent=1 // pred_region
      _
    $region21: #{state_tracker_gru_forward.1} parent=1 // pred_fallthru
      _
    // Predicated region
    $region22: #{state_tracker_gru_forward.1} parent=1 // pred_check
      _
    $region23: #{state_tracker_gru_forward.1} parent=1 // pred_check_branch
      %48 = sbr.rel (0) target = $region25
    $region24: #{state_tracker_gru_forward.1} parent=1 // pred_region
      _
    $region25: #{state_tracker_gru_forward.1} parent=1 // pred_fallthru
      _
    // Predicated region
    $region26: #{state_tracker_gru_forward.1} parent=1 // pred_check
      _
    $region27: #{state_tracker_gru_forward.1} parent=1 // pred_check_branch
      %50 = sbr.rel (0) target = $region29
    $region28: #{state_tracker_gru_forward.1} parent=1 // pred_region
      _
    $region29: #{state_tracker_gru_forward.1} parent=1 // pred_fallthru
      _
    // Predicated region
    $region30: #{state_tracker_gru_forward.1} parent=1 // pred_check
      _
    $region31: #{state_tracker_gru_forward.1} parent=1 // pred_check_branch
      %52 = sbr.rel (0) target = $region33
    $region32: #{state_tracker_gru_forward.1} parent=1 // pred_region
      _
    $region33: #{state_tracker_gru_forward.1} parent=1 // pred_fallthru
      _
    // Predicated region
    $region34: #{state_tracker_gru_forward.1} parent=1 // pred_check
      _
    $region35: #{state_tracker_gru_forward.1} parent=1 // pred_check_branch
      %54 = sbr.rel (0) target = $region37
    $region36: #{state_tracker_gru_forward.1} parent=1 // pred_region
      %55 = dma.done [#allocation5], 768
    $region37: #{state_tracker_gru_forward.1} parent=1 // pred_fallthru
      _
    // Predicated region
    $region38: #{state_tracker_gru_forward.1} parent=1 // pred_check
      _
    $region39: #{state_tracker_gru_forward.1} parent=1 // pred_check_branch
      %57 = sbr.rel (0) target = $region41
    $region40: #{state_tracker_gru_forward.1} parent=1 // pred_region
      %58 = dma.done [#allocation7], 3072
    $region41: #{state_tracker_gru_forward.1} parent=1 // pred_fallthru
      _
    %v60 = vld [vmem:[%s0] sm:$0xf]
    %v61 = vld [vmem:[%s0 + $0x4] sm:$0xf]
    %v62 = vld [vmem:[%s0 + $0x8] sm:$0xf]
    %v63 = vld [vmem:[%s0 + $0xc] sm:$0xf]
    %v64 = vld [vmem:[%s0 + $0x10] sm:$0xf]
    %v65 = vld [vmem:[%s0 + $0x14] sm:$0xf]
    %v66 = vld [vmem:[%s0 + $0x18] sm:$0xf]
    %v67 = vld [vmem:[%s0 + $0x1c] sm:$0xf]
    %v68 = vld [vmem:[#allocation4] sm:$0xff]
    %v69 = vld [vmem:[#allocation4 + $0x8] sm:$0xf]
    %v70 = vld [vmem:[#allocation4 + $0xc] sm:$0xff]
    %v71 = vld [vmem:[#allocation4 + $0x14] sm:$0xf]
    %v72 = vld [vmem:[#allocation4 + $0x18] sm:$0xff]
    %v73 = vld [vmem:[#allocation4 + $0x20] sm:$0xf]
    %v74 = vld [vmem:[#allocation4 + $0x24] sm:$0xff]
    %v75 = vld [vmem:[#allocation4 + $0x2c] sm:$0xf]
    %v76 = vld [vmem:[%s4] sm:$0x7]
    %v78 = vlaneseq
    %v79 = vshrl.u32 %v78, 7
    %v80 = vsub.s32 0, %v79
    %v81 = vrot.slane %v76, %v80
    %v82 = vlaneseq
    %v83 = vshrl.u32 %v82, 7
    %v84 = vsub.s32 1, %v83
    %v85 = vrot.slane %v76, %v84
    %v86 = vlaneseq
    %v87 = vshrl.u32 %v86, 7
    %v88 = vsub.s32 2, %v87
    %v89 = vrot.slane %v76, %v88
    %v101 = vunpack.c.l.b16 %v60
    %v102 = vunpack.c.l.b16 %v61
    %v103 = vunpack.c.l.b16 %v62
    %v104 = vunpack.c.l.b16 %v63
    %v105 = vunpack.c.l.b16 %v64
    %v106 = vunpack.c.l.b16 %v65
    %v107 = vunpack.c.l.b16 %v66
    %v108 = vunpack.c.l.b16 %v67
    %v109 = vpack.c.b16 %v102, %v101
    %v110 = vpack.c.b16 %v104, %v103
    %v111 = vpack.c.b16 %v106, %v105
    %v112 = vpack.c.b16 %v108, %v107
    %v121 = vunpack.c.l.b16 %v68
    %v122 = vunpack.c.h.b16 %v68
    %v123 = vunpack.c.l.b16 %v69
    %v124 = vunpack.c.l.b16 %v70
    %v125 = vunpack.c.h.b16 %v70
    %v126 = vunpack.c.l.b16 %v71
    %v127 = vunpack.c.l.b16 %v72
    %v128 = vunpack.c.h.b16 %v72
    %v129 = vunpack.c.l.b16 %v73
    %v130 = vunpack.c.l.b16 %v74
    %v131 = vunpack.c.h.b16 %v74
    %v132 = vunpack.c.l.b16 %v75
    %v133 = vpack.c.b16 %v124, %v121
    %v134 = vpack.c.b16 %v125, %v122
    %v135 = vpack.c.b16 %v126, %v123
    %v136 = vpack.c.b16 %v130, %v127
    %v137 = vpack.c.b16 %v131, %v128
    %v138 = vpack.c.b16 %v132, %v129
    %vm145 = vcmask 261120
    %v147 = vsel %vm145, %v109, 0
    %v150 = vsel %vm145, %v110, 0
    %v153 = vsel %vm145, %v111, 0
    %v156 = vsel %vm145, %v112, 0
    %158 = vmatprep.subr.bf16.mxu0 %v134
    %159 = vmatpush1.bf16.msra.mxu0 %v133
    %160 = vmatprep.subr.bf16.mxu0 %v137
    %161 = vmatpush1.bf16.msra.mxu0 %v136
    %162 = vmatprep.subr.bf16.mxu0 0
    %163 = vmatpush1.bf16.msra.mxu0 0
    %164 = vmatprep.subr.bf16.mxu0 0
    %165 = vmatpush1.bf16.msra.mxu0 0
    %166 = vmatprep.subr.bf16.mxu0 0
    %167 = vmatpush1.bf16.msra.mxu0 0
    %168 = vmatprep.subr.bf16.mxu0 0
    %169 = vmatpush1.bf16.msra.mxu0 0
    %170 = vmatprep.subr.bf16.mxu0 0
    %171 = vmatpush1.bf16.msra.mxu0 0
    %172 = vmatprep.subr.bf16.mxu0 0
    %173 = vmatpush1.bf16.msra.mxu0 0
    %174 = vmatprep.subr.bf16.mxu0 0
    %175 = vmatpush1.bf16.msra.mxu0 0
    %176 = vmatprep.subr.bf16.mxu0 0
    %177 = vmatpush1.bf16.msra.mxu0 0
    %178 = vmatprep.subr.bf16.mxu0 0
    %179 = vmatpush1.bf16.msra.mxu0 0
    %180 = vmatprep.subr.bf16.mxu0 0
    %181 = vmatpush1.bf16.msra.mxu0 0
    %182 = vmatprep.subr.bf16.mxu0 0
    %183 = vmatpush1.bf16.msra.mxu0 0
    %184 = vmatprep.subr.bf16.mxu0 0
    %185 = vmatpush1.bf16.msra.mxu0 0
    %186 = vmatprep.subr.bf16.mxu0 0
    %187 = vmatpush1.bf16.msra.mxu0 0
    %188 = vmatprep.subr.bf16.mxu0 0
    %189 = vmatpush1.bf16.msra.mxu0 0
    %190 = vmatprep.mubr.bf16.mxu0 0
    %191 = vmatmul.mubr.bf16.gmra.mrb[0].mxu0 %v147
    %v192 = vpop.f32.mrb[0].mxu0
    %v193 = vadd.f32 %v81, %v192
    %v194 = vpop.f32.mrb[0].mxu0
    %v195 = vadd.f32 %v85, %v194
    %v196 = vpop.f32.mrb[0].mxu0
    %v197 = vadd.f32 %v81, %v196
    %v198 = vpop.f32.mrb[0].mxu0
    %v199 = vadd.f32 %v85, %v198
    %200 = vmatprep.mubr.bf16.mxu0 0
    %201 = vmatmul.mubr.bf16.gmra.mrb[0].mxu0 %v150
    %v202 = vpop.f32.mrb[0].mxu0
    %v203 = vadd.f32 %v81, %v202
    %v204 = vpop.f32.mrb[0].mxu0
    %v205 = vadd.f32 %v85, %v204
    %v206 = vpop.f32.mrb[0].mxu0
    %v207 = vadd.f32 %v81, %v206
    %v208 = vpop.f32.mrb[0].mxu0
    %v209 = vadd.f32 %v85, %v208
    %210 = vmatprep.mubr.bf16.mxu0 0
    %211 = vmatmul.mubr.bf16.gmra.mrb[0].mxu0 %v153
    %v212 = vpop.f32.mrb[0].mxu0
    %v213 = vadd.f32 %v81, %v212
    %v214 = vpop.f32.mrb[0].mxu0
    %v215 = vadd.f32 %v85, %v214
    %v216 = vpop.f32.mrb[0].mxu0
    %v217 = vadd.f32 %v81, %v216
    %v218 = vpop.f32.mrb[0].mxu0
    %v219 = vadd.f32 %v85, %v218
    %220 = vmatprep.mubr.bf16.mxu0 0
    %221 = vmatmul.mubr.bf16.gmra.mrb[0].mxu0 %v156
    %v222 = vpop.f32.mrb[0].mxu0
    %v223 = vadd.f32 %v81, %v222
    %v224 = vpop.f32.mrb[0].mxu0
    %v225 = vadd.f32 %v85, %v224
    %v226 = vpop.f32.mrb[0].mxu0
    %v227 = vadd.f32 %v81, %v226
    %v228 = vpop.f32.mrb[0].mxu0
    %v229 = vadd.f32 %v85, %v228
    %230 = vdwg.mxu0
    %231 = vmatprep.subr.bf16.mxu0 0
    %232 = vmatpush1.bf16.msra.mxu0 %v135
    %233 = vmatprep.subr.bf16.mxu0 0
    %234 = vmatpush1.bf16.msra.mxu0 %v138
    %235 = vmatprep.subr.bf16.mxu0 0
    %236 = vmatpush1.bf16.msra.mxu0 0
    %237 = vmatprep.subr.bf16.mxu0 0
    %238 = vmatpush1.bf16.msra.mxu0 0
    %239 = vmatprep.subr.bf16.mxu0 0
    %240 = vmatpush1.bf16.msra.mxu0 0
    %241 = vmatprep.subr.bf16.mxu0 0
    %242 = vmatpush1.bf16.msra.mxu0 0
    %243 = vmatprep.subr.bf16.mxu0 0
    %244 = vmatpush1.bf16.msra.mxu0 0
    %245 = vmatprep.subr.bf16.mxu0 0
    %246 = vmatpush1.bf16.msra.mxu0 0
    %247 = vmatprep.subr.bf16.mxu0 0
    %248 = vmatpush1.bf16.msra.mxu0 0
    %249 = vmatprep.subr.bf16.mxu0 0
    %250 = vmatpush1.bf16.msra.mxu0 0
    %251 = vmatprep.subr.bf16.mxu0 0
    %252 = vmatpush1.bf16.msra.mxu0 0
    %253 = vmatprep.subr.bf16.mxu0 0
    %254 = vmatpush1.bf16.msra.mxu0 0
    %255 = vmatprep.subr.bf16.mxu0 0
    %256 = vmatpush1.bf16.msra.mxu0 0
    %257 = vmatprep.subr.bf16.mxu0 0
    %258 = vmatpush1.bf16.msra.mxu0 0
    %259 = vmatprep.subr.bf16.mxu0 0
    %260 = vmatpush1.bf16.msra.mxu0 0
    %261 = vmatprep.subr.bf16.mxu0 0
    %262 = vmatpush1.bf16.msra.mxu0 0
    %263 = vmatprep.mubr.bf16.mxu0 0
    %264 = vmatmul.mubr.bf16.gmra.mrb[0].mxu0 %v147
    %v265 = vpop.f32.mrb[0].mxu0
    %v266 = vadd.f32 %v89, %v265
    %v267 = vpop.f32.mrb[0].mxu0
    %v268 = vpop.f32.mrb[0].mxu0
    %v269 = vadd.f32 %v89, %v268
    %v270 = vpop.f32.mrb[0].mxu0
    %271 = vmatprep.mubr.bf16.mxu0 0
    %272 = vmatmul.mubr.bf16.gmra.mrb[0].mxu0 %v150
    %v273 = vpop.f32.mrb[0].mxu0
    %v274 = vadd.f32 %v89, %v273
    %v275 = vpop.f32.mrb[0].mxu0
    %v276 = vpop.f32.mrb[0].mxu0
    %v277 = vadd.f32 %v89, %v276
    %v278 = vpop.f32.mrb[0].mxu0
    %279 = vmatprep.mubr.bf16.mxu0 0
    %280 = vmatmul.mubr.bf16.gmra.mrb[0].mxu0 %v153
    %v281 = vpop.f32.mrb[0].mxu0
    %v282 = vadd.f32 %v89, %v281
    %v283 = vpop.f32.mrb[0].mxu0
    %v284 = vpop.f32.mrb[0].mxu0
    %v285 = vadd.f32 %v89, %v284
    %v286 = vpop.f32.mrb[0].mxu0
    %287 = vmatprep.mubr.bf16.mxu0 0
    %288 = vmatmul.mubr.bf16.gmra.mrb[0].mxu0 %v156
    %v289 = vpop.f32.mrb[0].mxu0
    %v290 = vadd.f32 %v89, %v289
    %v291 = vpop.f32.mrb[0].mxu0
    %v292 = vpop.f32.mrb[0].mxu0
    %v293 = vadd.f32 %v89, %v292
    %v294 = vpop.f32.mrb[0].mxu0
    %295 = vdwg.mxu0
    %296 = vst [vmem:[#allocation2] sm:$0xff] %v193
    %297 = vst [vmem:[#allocation2 + $0x8] sm:$0xff] %v195
    %298 = vst [vmem:[#allocation2 + $0x10] sm:$0xff] %v266
    %299 = vst [vmem:[#allocation2 + $0x18] sm:$0xff] %v197
    %300 = vst [vmem:[#allocation2 + $0x20] sm:$0xff] %v199
    %301 = vst [vmem:[#allocation2 + $0x28] sm:$0xff] %v269
    %302 = vst [vmem:[#allocation2 + $0x30] sm:$0xff] %v203
    %303 = vst [vmem:[#allocation2 + $0x38] sm:$0xff] %v205
    %304 = vst [vmem:[#allocation2 + $0x40] sm:$0xff] %v274
    %305 = vst [vmem:[#allocation2 + $0x48] sm:$0xff] %v207
    %306 = vst [vmem:[#allocation2 + $0x50] sm:$0xff] %v209
    %307 = vst [vmem:[#allocation2 + $0x58] sm:$0xff] %v277
    %308 = vst [vmem:[#allocation2 + $0x60] sm:$0xff] %v213
    %309 = vst [vmem:[#allocation2 + $0x68] sm:$0xff] %v215
    %310 = vst [vmem:[#allocation2 + $0x70] sm:$0xff] %v282
    %311 = vst [vmem:[#allocation2 + $0x78] sm:$0xff] %v217
    %312 = vst [vmem:[#allocation2 + $0x80] sm:$0xff] %v219
    %313 = vst [vmem:[#allocation2 + $0x88] sm:$0xff] %v285
    %314 = vst [vmem:[#allocation2 + $0x90] sm:$0xff] %v223
    %315 = vst [vmem:[#allocation2 + $0x98] sm:$0xff] %v225
    %316 = vst [vmem:[#allocation2 + $0xa0] sm:$0xff] %v290
    %317 = vst [vmem:[#allocation2 + $0xa8] sm:$0xff] %v227
    %318 = vst [vmem:[#allocation2 + $0xb0] sm:$0xff] %v229
    %319 = vst [vmem:[#allocation2 + $0xb8] sm:$0xff] %v293
    %v320 = vld [vmem:[#allocation6] sm:$0xff]
    %v321 = vld [vmem:[#allocation6 + $0x8] sm:$0xf]
    %v322 = vld [vmem:[#allocation6 + $0xc] sm:$0xff]
    %v323 = vld [vmem:[#allocation6 + $0x14] sm:$0xf]
    %v324 = vld [vmem:[#allocation6 + $0x18] sm:$0xff]
    %v325 = vld [vmem:[#allocation6 + $0x20] sm:$0xf]
    %v326 = vld [vmem:[#allocation6 + $0x24] sm:$0xff]
    %v327 = vld [vmem:[#allocation6 + $0x2c] sm:$0xf]
    %v328 = vld [vmem:[#allocation6 + $0x30] sm:$0xff]
    %v329 = vld [vmem:[#allocation6 + $0x38] sm:$0xf]
    %v330 = vld [vmem:[#allocation6 + $0x3c] sm:$0xff]
    %v331 = vld [vmem:[#allocation6 + $0x44] sm:$0xf]
    %v332 = vld [vmem:[#allocation6 + $0x48] sm:$0xff]
    %v333 = vld [vmem:[#allocation6 + $0x50] sm:$0xf]
    %v334 = vld [vmem:[#allocation6 + $0x54] sm:$0xff]
    %v335 = vld [vmem:[#allocation6 + $0x5c] sm:$0xf]
    %v336 = vld [vmem:[#allocation6 + $0x60] sm:$0xff]
    %v337 = vld [vmem:[#allocation6 + $0x68] sm:$0xf]
    %v338 = vld [vmem:[#allocation6 + $0x6c] sm:$0xff]
    %v339 = vld [vmem:[#allocation6 + $0x74] sm:$0xf]
    %v340 = vld [vmem:[#allocation6 + $0x78] sm:$0xff]
    %v341 = vld [vmem:[#allocation6 + $0x80] sm:$0xf]
    %v342 = vld [vmem:[#allocation6 + $0x84] sm:$0xff]
    %v343 = vld [vmem:[#allocation6 + $0x8c] sm:$0xf]
    %v344 = vld [vmem:[#allocation6 + $0x90] sm:$0xff]
    %v345 = vld [vmem:[#allocation6 + $0x98] sm:$0xf]
    %v346 = vld [vmem:[#allocation6 + $0x9c] sm:$0xff]
    %v347 = vld [vmem:[#allocation6 + $0xa4] sm:$0xf]
    %v348 = vld [vmem:[#allocation6 + $0xa8] sm:$0xff]
    %v349 = vld [vmem:[#allocation6 + $0xb0] sm:$0xf]
    %v350 = vld [vmem:[#allocation6 + $0xb4] sm:$0xff]
    %v351 = vld [vmem:[#allocation6 + $0xbc] sm:$0xf]
    %v352 = vld [vmem:[%s5] sm:$0x1]
    %v354 = vlaneseq
    %v355 = vshrl.u32 %v354, 7
    %v356 = vsub.s32 0, %v355
    %v357 = vrot.slane %v352, %v356
    %v359 = vld [vmem:[%s1] sm:$0xff]
    %v360 = vld [vmem:[#allocation2] sm:$0xff]
    %v361 = vld [vmem:[#allocation2 + $0x8] sm:$0xff]
    %v362 = vld [vmem:[#allocation2 + $0x10] sm:$0xff]
    %v363 = vpack.c.bf16 %v359, %v359
    %v396 = vunpack.c.l.b16 %v320
    %v397 = vunpack.c.h.b16 %v320
    %v398 = vunpack.c.l.b16 %v321
    %v399 = vunpack.c.l.b16 %v322
    %v400 = vunpack.c.h.b16 %v322
    %v401 = vunpack.c.l.b16 %v323
    %v402 = vunpack.c.l.b16 %v324
    %v403 = vunpack.c.h.b16 %v324
    %v404 = vunpack.c.l.b16 %v325
    %v405 = vunpack.c.l.b16 %v326
    %v406 = vunpack.c.h.b16 %v326
    %v407 = vunpack.c.l.b16 %v327
    %v408 = vunpack.c.l.b16 %v328
    %v409 = vunpack.c.h.b16 %v328
    %v410 = vunpack.c.l.b16 %v329
    %v411 = vunpack.c.l.b16 %v330
    %v412 = vunpack.c.h.b16 %v330
    %v413 = vunpack.c.l.b16 %v331
    %v414 = vunpack.c.l.b16 %v332
    %v415 = vunpack.c.h.b16 %v332
    %v416 = vunpack.c.l.b16 %v333
    %v417 = vunpack.c.l.b16 %v334
    %v418 = vunpack.c.h.b16 %v334
    %v419 = vunpack.c.l.b16 %v335
    %v420 = vunpack.c.l.b16 %v336
    %v421 = vunpack.c.h.b16 %v336
    %v422 = vunpack.c.l.b16 %v337
    %v423 = vunpack.c.l.b16 %v338
    %v424 = vunpack.c.h.b16 %v338
    %v425 = vunpack.c.l.b16 %v339
    %v426 = vunpack.c.l.b16 %v340
    %v427 = vunpack.c.h.b16 %v340
    %v428 = vunpack.c.l.b16 %v341
    %v429 = vunpack.c.l.b16 %v342
    %v430 = vunpack.c.h.b16 %v342
    %v431 = vunpack.c.l.b16 %v343
    %v432 = vunpack.c.l.b16 %v344
    %v433 = vunpack.c.h.b16 %v344
    %v434 = vunpack.c.l.b16 %v345
    %v435 = vunpack.c.l.b16 %v346
    %v436 = vunpack.c.h.b16 %v346
    %v437 = vunpack.c.l.b16 %v347
    %v438 = vunpack.c.l.b16 %v348
    %v439 = vunpack.c.h.b16 %v348
    %v440 = vunpack.c.l.b16 %v349
    %v441 = vunpack.c.l.b16 %v350
    %v442 = vunpack.c.h.b16 %v350
    %v443 = vunpack.c.l.b16 %v351
    %v444 = vpack.c.b16 %v399, %v396
    %v445 = vpack.c.b16 %v400, %v397
    %v446 = vpack.c.b16 %v401, %v398
    %v447 = vpack.c.b16 %v405, %v402
    %v448 = vpack.c.b16 %v406, %v403
    %v449 = vpack.c.b16 %v407, %v404
    %v450 = vpack.c.b16 %v411, %v408
    %v451 = vpack.c.b16 %v412, %v409
    %v452 = vpack.c.b16 %v413, %v410
    %v453 = vpack.c.b16 %v417, %v414
    %v454 = vpack.c.b16 %v418, %v415
    %v455 = vpack.c.b16 %v419, %v416
    %v456 = vpack.c.b16 %v423, %v420
    %v457 = vpack.c.b16 %v424, %v421
    %v458 = vpack.c.b16 %v425, %v422
    %v459 = vpack.c.b16 %v429, %v426
    %v460 = vpack.c.b16 %v430, %v427
    %v461 = vpack.c.b16 %v431, %v428
    %v462 = vpack.c.b16 %v435, %v432
    %v463 = vpack.c.b16 %v436, %v433
    %v464 = vpack.c.b16 %v437, %v434
    %v465 = vpack.c.b16 %v441, %v438
    %v466 = vpack.c.b16 %v442, %v439
    %v467 = vpack.c.b16 %v443, %v440
    %492 = vmatprep.subr.bf16.mxu0 %v445
    %493 = vmatpush1.bf16.msra.mxu0 %v444
    %494 = vmatprep.subr.bf16.mxu0 %v448
    %495 = vmatpush1.bf16.msra.mxu0 %v447
    %496 = vmatprep.subr.bf16.mxu0 %v451
    %497 = vmatpush1.bf16.msra.mxu0 %v450
    %498 = vmatprep.subr.bf16.mxu0 %v454
    %499 = vmatpush1.bf16.msra.mxu0 %v453
    %500 = vmatprep.subr.bf16.mxu0 %v457
    %501 = vmatpush1.bf16.msra.mxu0 %v456
    %502 = vmatprep.subr.bf16.mxu0 %v460
    %503 = vmatpush1.bf16.msra.mxu0 %v459
    %504 = vmatprep.subr.bf16.mxu0 %v463
    %505 = vmatpush1.bf16.msra.mxu0 %v462
    %506 = vmatprep.subr.bf16.mxu0 %v466
    %507 = vmatpush1.bf16.msra.mxu0 %v465
    %508 = vmatprep.subr.bf16.mxu0 0
    %509 = vmatpush1.bf16.msra.mxu0 0
    %510 = vmatprep.subr.bf16.mxu0 0
    %511 = vmatpush1.bf16.msra.mxu0 0
    %512 = vmatprep.subr.bf16.mxu0 0
    %513 = vmatpush1.bf16.msra.mxu0 0
    %514 = vmatprep.subr.bf16.mxu0 0
    %515 = vmatpush1.bf16.msra.mxu0 0
    %516 = vmatprep.subr.bf16.mxu0 0
    %517 = vmatpush1.bf16.msra.mxu0 0
    %518 = vmatprep.subr.bf16.mxu0 0
    %519 = vmatpush1.bf16.msra.mxu0 0
    %520 = vmatprep.subr.bf16.mxu0 0
    %521 = vmatpush1.bf16.msra.mxu0 0
    %522 = vmatprep.subr.bf16.mxu0 0
    %523 = vmatpush1.bf16.msra.mxu0 0
    %524 = vmatprep.mubr.bf16.mxu0 0
    %525 = vmatmul.mubr.bf16.gmra.mrb[0].mxu0 %v363
    %v526 = vpop.f32.mrb[0].mxu0
    %v527 = vadd.f32 0.0, %v526
    %v528 = vpop.f32.mrb[0].mxu0
    %v529 = vadd.f32 0.0, %v528
    %v530 = vpop.f32.mrb[0].mxu0
    %v531 = vpop.f32.mrb[0].mxu0
    %532 = vdwg.mxu0
    %533 = vmatprep.subr.bf16.mxu0 0
    %534 = vmatpush1.bf16.msra.mxu0 %v446
    %535 = vmatprep.subr.bf16.mxu0 0
    %536 = vmatpush1.bf16.msra.mxu0 %v449
    %537 = vmatprep.subr.bf16.mxu0 0
    %538 = vmatpush1.bf16.msra.mxu0 %v452
    %539 = vmatprep.subr.bf16.mxu0 0
    %540 = vmatpush1.bf16.msra.mxu0 %v455
    %541 = vmatprep.subr.bf16.mxu0 0
    %542 = vmatpush1.bf16.msra.mxu0 %v458
    %543 = vmatprep.subr.bf16.mxu0 0
    %544 = vmatpush1.bf16.msra.mxu0 %v461
    %545 = vmatprep.subr.bf16.mxu0 0
    %546 = vmatpush1.bf16.msra.mxu0 %v464
    %547 = vmatprep.subr.bf16.mxu0 0
    %548 = vmatpush1.bf16.msra.mxu0 %v467
    %549 = vmatprep.subr.bf16.mxu0 0
    %550 = vmatpush1.bf16.msra.mxu0 0
    %551 = vmatprep.subr.bf16.mxu0 0
    %552 = vmatpush1.bf16.msra.mxu0 0
    %553 = vmatprep.subr.bf16.mxu0 0
    %554 = vmatpush1.bf16.msra.mxu0 0
    %555 = vmatprep.subr.bf16.mxu0 0
    %556 = vmatpush1.bf16.msra.mxu0 0
    %557 = vmatprep.subr.bf16.mxu0 0
    %558 = vmatpush1.bf16.msra.mxu0 0
    %559 = vmatprep.subr.bf16.mxu0 0
    %560 = vmatpush1.bf16.msra.mxu0 0
    %561 = vmatprep.subr.bf16.mxu0 0
    %562 = vmatpush1.bf16.msra.mxu0 0
    %563 = vmatprep.subr.bf16.mxu0 0
    %564 = vmatpush1.bf16.msra.mxu0 0
    %565 = vmatprep.mubr.bf16.mxu0 0
    %566 = vmatmul.mubr.bf16.gmra.mrb[0].mxu0 %v363
    %v567 = vpop.f32.mrb[0].mxu0
    %v568 = vadd.f32 0.0, %v567
    %v569 = vpop.f32.mrb[0].mxu0
    %v570 = vpop.f32.mrb[0].mxu0
    %v571 = vpop.f32.mrb[0].mxu0
    %572 = vdwg.mxu0
    %v573 = vadd.f32 %v360, %v527
    %v574 = vxor.u32 %v573, 2147483648
    %v575 = vmul.f32 %v574, 1.442695
    %v576 = vpow.pop %v575
    %v577 = vadd.f32 %v576, 1.0
    %v578 = vrcp.pop %v577
    %v579 = vmul.f32 1.0, %v578
    %v580 = vadd.f32 %v361, %v529
    %v581 = vxor.u32 %v580, 2147483648
    %v582 = vmul.f32 %v581, 1.442695
    %v583 = vpow.pop %v582
    %v584 = vadd.f32 %v583, 1.0
    %v585 = vrcp.pop %v584
    %v586 = vmul.f32 1.0, %v585
    %v587 = vadd.f32 %v568, %v357
    %v588 = vmul.f32 %v579, %v587
    %v589 = vadd.f32 %v362, %v588
    %v590 = vtanh.pop %v589
    %v591 = vsub.f32 1.0, %v586
    %v592 = vmul.f32 %v591, %v590
    %v593 = vmul.f32 %v586, %v359
    %v594 = vadd.f32 %v592, %v593
    %595 = vst [vmem:[#allocation3] sm:$0xff] %v594
    %s596 = scalar_lea.vmem [#allocation2], 24
    %v597 = vld [vmem:[%s596] sm:$0xff]
    %v598 = vld [vmem:[%s596 + $0x8] sm:$0xff]
    %v599 = vld [vmem:[%s596 + $0x10] sm:$0xff]
    %v600 = vpack.c.bf16 %v594, %v594
    %601 = vmatprep.subr.bf16.mxu0 %v445
    %602 = vmatpush1.bf16.msra.mxu0 %v444
    %603 = vmatprep.subr.bf16.mxu0 %v448
    %604 = vmatpush1.bf16.msra.mxu0 %v447
    %605 = vmatprep.subr.bf16.mxu0 %v451
    %606 = vmatpush1.bf16.msra.mxu0 %v450
    %607 = vmatprep.subr.bf16.mxu0 %v454
    %608 = vmatpush1.bf16.msra.mxu0 %v453
    %609 = vmatprep.subr.bf16.mxu0 %v457
    %610 = vmatpush1.bf16.msra.mxu0 %v456
    %611 = vmatprep.subr.bf16.mxu0 %v460
    %612 = vmatpush1.bf16.msra.mxu0 %v459
    %613 = vmatprep.subr.bf16.mxu0 %v463
    %614 = vmatpush1.bf16.msra.mxu0 %v462
    %615 = vmatprep.subr.bf16.mxu0 %v466
    %616 = vmatpush1.bf16.msra.mxu0 %v465
    %617 = vmatprep.subr.bf16.mxu0 0
    %618 = vmatpush1.bf16.msra.mxu0 0
    %619 = vmatprep.subr.bf16.mxu0 0
    %620 = vmatpush1.bf16.msra.mxu0 0
    %621 = vmatprep.subr.bf16.mxu0 0
    %622 = vmatpush1.bf16.msra.mxu0 0
    %623 = vmatprep.subr.bf16.mxu0 0
    %624 = vmatpush1.bf16.msra.mxu0 0
    %625 = vmatprep.subr.bf16.mxu0 0
    %626 = vmatpush1.bf16.msra.mxu0 0
    %627 = vmatprep.subr.bf16.mxu0 0
    %628 = vmatpush1.bf16.msra.mxu0 0
    %629 = vmatprep.subr.bf16.mxu0 0
    %630 = vmatpush1.bf16.msra.mxu0 0
    %631 = vmatprep.subr.bf16.mxu0 0
    %632 = vmatpush1.bf16.msra.mxu0 0
    %633 = vmatprep.mubr.bf16.mxu0 0
    %634 = vmatmul.mubr.bf16.gmra.mrb[0].mxu0 %v600
    %v635 = vpop.f32.mrb[0].mxu0
    %v636 = vadd.f32 0.0, %v635
    %v637 = vpop.f32.mrb[0].mxu0
    %v638 = vadd.f32 0.0, %v637
    %v639 = vpop.f32.mrb[0].mxu0
    %v640 = vpop.f32.mrb[0].mxu0
    %641 = vdwg.mxu0
    %642 = vmatprep.subr.bf16.mxu0 0
    %643 = vmatpush1.bf16.msra.mxu0 %v446
    %644 = vmatprep.subr.bf16.mxu0 0
    %645 = vmatpush1.bf16.msra.mxu0 %v449
    %646 = vmatprep.subr.bf16.mxu0 0
    %647 = vmatpush1.bf16.msra.mxu0 %v452
    %648 = vmatprep.subr.bf16.mxu0 0
    %649 = vmatpush1.bf16.msra.mxu0 %v455
    %650 = vmatprep.subr.bf16.mxu0 0
    %651 = vmatpush1.bf16.msra.mxu0 %v458
    %652 = vmatprep.subr.bf16.mxu0 0
    %653 = vmatpush1.bf16.msra.mxu0 %v461
    %654 = vmatprep.subr.bf16.mxu0 0
    %655 = vmatpush1.bf16.msra.mxu0 %v464
    %656 = vmatprep.subr.bf16.mxu0 0
    %657 = vmatpush1.bf16.msra.mxu0 %v467
    %658 = vmatprep.subr.bf16.mxu0 0
    %659 = vmatpush1.bf16.msra.mxu0 0
    %660 = vmatprep.subr.bf16.mxu0 0
    %661 = vmatpush1.bf16.msra.mxu0 0
    %662 = vmatprep.subr.bf16.mxu0 0
    %663 = vmatpush1.bf16.msra.mxu0 0
    %664 = vmatprep.subr.bf16.mxu0 0
    %665 = vmatpush1.bf16.msra.mxu0 0
    %666 = vmatprep.subr.bf16.mxu0 0
    %667 = vmatpush1.bf16.msra.mxu0 0
    %668 = vmatprep.subr.bf16.mxu0 0
    %669 = vmatpush1.bf16.msra.mxu0 0
    %670 = vmatprep.subr.bf16.mxu0 0
    %671 = vmatpush1.bf16.msra.mxu0 0
    %672 = vmatprep.subr.bf16.mxu0 0
    %673 = vmatpush1.bf16.msra.mxu0 0
    %674 = vmatprep.mubr.bf16.mxu0 0
    %675 = vmatmul.mubr.bf16.gmra.mrb[0].mxu0 %v600
    %v676 = vpop.f32.mrb[0].mxu0
    %v677 = vadd.f32 0.0, %v676
    %v678 = vpop.f32.mrb[0].mxu0
    %v679 = vpop.f32.mrb[0].mxu0
    %v680 = vpop.f32.mrb[0].mxu0
    %681 = vdwg.mxu0
    %v682 = vadd.f32 %v597, %v636
    %v683 = vxor.u32 %v682, 2147483648
    %v684 = vmul.f32 %v683, 1.442695
    %v685 = vpow.pop %v684
    %v686 = vadd.f32 %v685, 1.0
    %v687 = vrcp.pop %v686
    %v688 = vmul.f32 1.0, %v687
    %v689 = vadd.f32 %v598, %v638
    %v690 = vxor.u32 %v689, 2147483648
    %v691 = vmul.f32 %v690, 1.442695
    %v692 = vpow.pop %v691
    %v693 = vadd.f32 %v692, 1.0
    %v694 = vrcp.pop %v693
    %v695 = vmul.f32 1.0, %v694
    %v696 = vadd.f32 %v677, %v357
    %v697 = vmul.f32 %v688, %v696
    %v698 = vadd.f32 %v599, %v697
    %v699 = vtanh.pop %v698
    %v700 = vsub.f32 1.0, %v695
    %v701 = vmul.f32 %v700, %v699
    %v702 = vmul.f32 %v695, %v594
    %v703 = vadd.f32 %v701, %v702
    %s704 = scalar_lea.vmem [#allocation3], 8
    %705 = vst [vmem:[%s704] sm:$0xff] %v703
    %s706 = scalar_lea.vmem [#allocation2], 48
    %v707 = vld [vmem:[%s706] sm:$0xff]
    %v708 = vld [vmem:[%s706 + $0x8] sm:$0xff]
    %v709 = vld [vmem:[%s706 + $0x10] sm:$0xff]
    %v710 = vpack.c.bf16 %v703, %v703
    %711 = vmatprep.subr.bf16.mxu0 %v445
    %712 = vmatpush1.bf16.msra.mxu0 %v444
    %713 = vmatprep.subr.bf16.mxu0 %v448
    %714 = vmatpush1.bf16.msra.mxu0 %v447
    %715 = vmatprep.subr.bf16.mxu0 %v451
    %716 = vmatpush1.bf16.msra.mxu0 %v450
    %717 = vmatprep.subr.bf16.mxu0 %v454
    %718 = vmatpush1.bf16.msra.mxu0 %v453
    %719 = vmatprep.subr.bf16.mxu0 %v457
    %720 = vmatpush1.bf16.msra.mxu0 %v456
    %721 = vmatprep.subr.bf16.mxu0 %v460
    %722 = vmatpush1.bf16.msra.mxu0 %v459
    %723 = vmatprep.subr.bf16.mxu0 %v463
    %724 = vmatpush1.bf16.msra.mxu0 %v462
    %725 = vmatprep.subr.bf16.mxu0 %v466
    %726 = vmatpush1.bf16.msra.mxu0 %v465
    %727 = vmatprep.subr.bf16.mxu0 0
    %728 = vmatpush1.bf16.msra.mxu0 0
    %729 = vmatprep.subr.bf16.mxu0 0
    %730 = vmatpush1.bf16.msra.mxu0 0
    %731 = vmatprep.subr.bf16.mxu0 0
    %732 = vmatpush1.bf16.msra.mxu0 0
    %733 = vmatprep.subr.bf16.mxu0 0
    %734 = vmatpush1.bf16.msra.mxu0 0
    %735 = vmatprep.subr.bf16.mxu0 0
    %736 = vmatpush1.bf16.msra.mxu0 0
    %737 = vmatprep.subr.bf16.mxu0 0
    %738 = vmatpush1.bf16.msra.mxu0 0
    %739 = vmatprep.subr.bf16.mxu0 0
    %740 = vmatpush1.bf16.msra.mxu0 0
    %741 = vmatprep.subr.bf16.mxu0 0
    %742 = vmatpush1.bf16.msra.mxu0 0
    %743 = vmatprep.mubr.bf16.mxu0 0
    %744 = vmatmul.mubr.bf16.gmra.mrb[0].mxu0 %v710
    %v745 = vpop.f32.mrb[0].mxu0
    %v746 = vadd.f32 0.0, %v745
    %v747 = vpop.f32.mrb[0].mxu0
    %v748 = vadd.f32 0.0, %v747
    %v749 = vpop.f32.mrb[0].mxu0
    %v750 = vpop.f32.mrb[0].mxu0
    %751 = vdwg.mxu0
    %752 = vmatprep.subr.bf16.mxu0 0
    %753 = vmatpush1.bf16.msra.mxu0 %v446
    %754 = vmatprep.subr.bf16.mxu0 0
    %755 = vmatpush1.bf16.msra.mxu0 %v449
    %756 = vmatprep.subr.bf16.mxu0 0
    %757 = vmatpush1.bf16.msra.mxu0 %v452
    %758 = vmatprep.subr.bf16.mxu0 0
    %759 = vmatpush1.bf16.msra.mxu0 %v455
    %760 = vmatprep.subr.bf16.mxu0 0
    %761 = vmatpush1.bf16.msra.mxu0 %v458
    %762 = vmatprep.subr.bf16.mxu0 0
    %763 = vmatpush1.bf16.msra.mxu0 %v461
    %764 = vmatprep.subr.bf16.mxu0 0
    %765 = vmatpush1.bf16.msra.mxu0 %v464
    %766 = vmatprep.subr.bf16.mxu0 0
    %767 = vmatpush1.bf16.msra.mxu0 %v467
    %768 = vmatprep.subr.bf16.mxu0 0
    %769 = vmatpush1.bf16.msra.mxu0 0
    %770 = vmatprep.subr.bf16.mxu0 0
    %771 = vmatpush1.bf16.msra.mxu0 0
    %772 = vmatprep.subr.bf16.mxu0 0
    %773 = vmatpush1.bf16.msra.mxu0 0
    %774 = vmatprep.subr.bf16.mxu0 0
    %775 = vmatpush1.bf16.msra.mxu0 0
    %776 = vmatprep.subr.bf16.mxu0 0
    %777 = vmatpush1.bf16.msra.mxu0 0
    %778 = vmatprep.subr.bf16.mxu0 0
    %779 = vmatpush1.bf16.msra.mxu0 0
    %780 = vmatprep.subr.bf16.mxu0 0
    %781 = vmatpush1.bf16.msra.mxu0 0
    %782 = vmatprep.subr.bf16.mxu0 0
    %783 = vmatpush1.bf16.msra.mxu0 0
    %784 = vmatprep.mubr.bf16.mxu0 0
    %785 = vmatmul.mubr.bf16.gmra.mrb[0].mxu0 %v710
    %v786 = vpop.f32.mrb[0].mxu0
    %v787 = vadd.f32 0.0, %v786
    %v788 = vpop.f32.mrb[0].mxu0
    %v789 = vpop.f32.mrb[0].mxu0
    %v790 = vpop.f32.mrb[0].mxu0
    %791 = vdwg.mxu0
    %v792 = vadd.f32 %v707, %v746
    %v793 = vxor.u32 %v792, 2147483648
    %v794 = vmul.f32 %v793, 1.442695
    %v795 = vpow.pop %v794
    %v796 = vadd.f32 %v795, 1.0
    %v797 = vrcp.pop %v796
    %v798 = vmul.f32 1.0, %v797
    %v799 = vadd.f32 %v708, %v748
    %v800 = vxor.u32 %v799, 2147483648
    %v801 = vmul.f32 %v800, 1.442695
    %v802 = vpow.pop %v801
    %v803 = vadd.f32 %v802, 1.0
    %v804 = vrcp.pop %v803
    %v805 = vmul.f32 1.0, %v804
    %v806 = vadd.f32 %v787, %v357
    %v807 = vmul.f32 %v798, %v806
    %v808 = vadd.f32 %v709, %v807
    %v809 = vtanh.pop %v808
    %v810 = vsub.f32 1.0, %v805
    %v811 = vmul.f32 %v810, %v809
    %v812 = vmul.f32 %v805, %v703
    %v813 = vadd.f32 %v811, %v812
    %s814 = scalar_lea.vmem [#allocation3], 16
    %815 = vst [vmem:[%s814] sm:$0xff] %v813
    %s816 = scalar_lea.vmem [#allocation2], 72
    %v817 = vld [vmem:[%s816] sm:$0xff]
    %v818 = vld [vmem:[%s816 + $0x8] sm:$0xff]
    %v819 = vld [vmem:[%s816 + $0x10] sm:$0xff]
    %v820 = vpack.c.bf16 %v813, %v813
    %821 = vmatprep.subr.bf16.mxu0 %v445
    %822 = vmatpush1.bf16.msra.mxu0 %v444
    %823 = vmatprep.subr.bf16.mxu0 %v448
    %824 = vmatpush1.bf16.msra.mxu0 %v447
    %825 = vmatprep.subr.bf16.mxu0 %v451
    %826 = vmatpush1.bf16.msra.mxu0 %v450
    %827 = vmatprep.subr.bf16.mxu0 %v454
    %828 = vmatpush1.bf16.msra.mxu0 %v453
    %829 = vmatprep.subr.bf16.mxu0 %v457
    %830 = vmatpush1.bf16.msra.mxu0 %v456
    %831 = vmatprep.subr.bf16.mxu0 %v460
    %832 = vmatpush1.bf16.msra.mxu0 %v459
    %833 = vmatprep.subr.bf16.mxu0 %v463
    %834 = vmatpush1.bf16.msra.mxu0 %v462
    %835 = vmatprep.subr.bf16.mxu0 %v466
    %836 = vmatpush1.bf16.msra.mxu0 %v465
    %837 = vmatprep.subr.bf16.mxu0 0
    %838 = vmatpush1.bf16.msra.mxu0 0
    %839 = vmatprep.subr.bf16.mxu0 0
    %840 = vmatpush1.bf16.msra.mxu0 0
    %841 = vmatprep.subr.bf16.mxu0 0
    %842 = vmatpush1.bf16.msra.mxu0 0
    %843 = vmatprep.subr.bf16.mxu0 0
    %844 = vmatpush1.bf16.msra.mxu0 0
    %845 = vmatprep.subr.bf16.mxu0 0
    %846 = vmatpush1.bf16.msra.mxu0 0
    %847 = vmatprep.subr.bf16.mxu0 0
    %848 = vmatpush1.bf16.msra.mxu0 0
    %849 = vmatprep.subr.bf16.mxu0 0
    %850 = vmatpush1.bf16.msra.mxu0 0
    %851 = vmatprep.subr.bf16.mxu0 0
    %852 = vmatpush1.bf16.msra.mxu0 0
    %853 = vmatprep.mubr.bf16.mxu0 0
    %854 = vmatmul.mubr.bf16.gmra.mrb[0].mxu0 %v820
    %v855 = vpop.f32.mrb[0].mxu0
    %v856 = vadd.f32 0.0, %v855
    %v857 = vpop.f32.mrb[0].mxu0
    %v858 = vadd.f32 0.0, %v857
    %v859 = vpop.f32.mrb[0].mxu0
    %v860 = vpop.f32.mrb[0].mxu0
    %861 = vdwg.mxu0
    %862 = vmatprep.subr.bf16.mxu0 0
    %863 = vmatpush1.bf16.msra.mxu0 %v446
    %864 = vmatprep.subr.bf16.mxu0 0
    %865 = vmatpush1.bf16.msra.mxu0 %v449
    %866 = vmatprep.subr.bf16.mxu0 0
    %867 = vmatpush1.bf16.msra.mxu0 %v452
    %868 = vmatprep.subr.bf16.mxu0 0
    %869 = vmatpush1.bf16.msra.mxu0 %v455
    %870 = vmatprep.subr.bf16.mxu0 0
    %871 = vmatpush1.bf16.msra.mxu0 %v458
    %872 = vmatprep.subr.bf16.mxu0 0
    %873 = vmatpush1.bf16.msra.mxu0 %v461
    %874 = vmatprep.subr.bf16.mxu0 0
    %875 = vmatpush1.bf16.msra.mxu0 %v464
    %876 = vmatprep.subr.bf16.mxu0 0
    %877 = vmatpush1.bf16.msra.mxu0 %v467
    %878 = vmatprep.subr.bf16.mxu0 0
    %879 = vmatpush1.bf16.msra.mxu0 0
    %880 = vmatprep.subr.bf16.mxu0 0
    %881 = vmatpush1.bf16.msra.mxu0 0
    %882 = vmatprep.subr.bf16.mxu0 0
    %883 = vmatpush1.bf16.msra.mxu0 0
    %884 = vmatprep.subr.bf16.mxu0 0
    %885 = vmatpush1.bf16.msra.mxu0 0
    %886 = vmatprep.subr.bf16.mxu0 0
    %887 = vmatpush1.bf16.msra.mxu0 0
    %888 = vmatprep.subr.bf16.mxu0 0
    %889 = vmatpush1.bf16.msra.mxu0 0
    %890 = vmatprep.subr.bf16.mxu0 0
    %891 = vmatpush1.bf16.msra.mxu0 0
    %892 = vmatprep.subr.bf16.mxu0 0
    %893 = vmatpush1.bf16.msra.mxu0 0
    %894 = vmatprep.mubr.bf16.mxu0 0
    %895 = vmatmul.mubr.bf16.gmra.mrb[0].mxu0 %v820
    %v896 = vpop.f32.mrb[0].mxu0
    %v897 = vadd.f32 0.0, %v896
    %v898 = vpop.f32.mrb[0].mxu0
    %v899 = vpop.f32.mrb[0].mxu0
    %v900 = vpop.f32.mrb[0].mxu0
    %901 = vdwg.mxu0
    %v902 = vadd.f32 %v817, %v856
    %v903 = vxor.u32 %v902, 2147483648
    %v904 = vmul.f32 %v903, 1.442695
    %v905 = vpow.pop %v904
    %v906 = vadd.f32 %v905, 1.0
    %v907 = vrcp.pop %v906
    %v908 = vmul.f32 1.0, %v907
    %v909 = vadd.f32 %v818, %v858
    %v910 = vxor.u32 %v909, 2147483648
    %v911 = vmul.f32 %v910, 1.442695
    %v912 = vpow.pop %v911
    %v913 = vadd.f32 %v912, 1.0
    %v914 = vrcp.pop %v913
    %v915 = vmul.f32 1.0, %v914
    %v916 = vadd.f32 %v897, %v357
    %v917 = vmul.f32 %v908, %v916
    %v918 = vadd.f32 %v819, %v917
    %v919 = vtanh.pop %v918
    %v920 = vsub.f32 1.0, %v915
    %v921 = vmul.f32 %v920, %v919
    %v922 = vmul.f32 %v915, %v813
    %v923 = vadd.f32 %v921, %v922
    %s924 = scalar_lea.vmem [#allocation3], 24
    %925 = vst [vmem:[%s924] sm:$0xff] %v923
    %s926 = scalar_lea.vmem [#allocation2], 96
    %v927 = vld [vmem:[%s926] sm:$0xff]
    %v928 = vld [vmem:[%s926 + $0x8] sm:$0xff]
    %v929 = vld [vmem:[%s926 + $0x10] sm:$0xff]
    %v930 = vpack.c.bf16 %v923, %v923
    %931 = vmatprep.subr.bf16.mxu0 %v445
    %932 = vmatpush1.bf16.msra.mxu0 %v444
    %933 = vmatprep.subr.bf16.mxu0 %v448
    %934 = vmatpush1.bf16.msra.mxu0 %v447
    %935 = vmatprep.subr.bf16.mxu0 %v451
    %936 = vmatpush1.bf16.msra.mxu0 %v450
    %937 = vmatprep.subr.bf16.mxu0 %v454
    %938 = vmatpush1.bf16.msra.mxu0 %v453
    %939 = vmatprep.subr.bf16.mxu0 %v457
    %940 = vmatpush1.bf16.msra.mxu0 %v456
    %941 = vmatprep.subr.bf16.mxu0 %v460
    %942 = vmatpush1.bf16.msra.mxu0 %v459
    %943 = vmatprep.subr.bf16.mxu0 %v463
    %944 = vmatpush1.bf16.msra.mxu0 %v462
    %945 = vmatprep.subr.bf16.mxu0 %v466
    %946 = vmatpush1.bf16.msra.mxu0 %v465
    %947 = vmatprep.subr.bf16.mxu0 0
    %948 = vmatpush1.bf16.msra.mxu0 0
    %949 = vmatprep.subr.bf16.mxu0 0
    %950 = vmatpush1.bf16.msra.mxu0 0
    %951 = vmatprep.subr.bf16.mxu0 0
    %952 = vmatpush1.bf16.msra.mxu0 0
    %953 = vmatprep.subr.bf16.mxu0 0
    %954 = vmatpush1.bf16.msra.mxu0 0
    %955 = vmatprep.subr.bf16.mxu0 0
    %956 = vmatpush1.bf16.msra.mxu0 0
    %957 = vmatprep.subr.bf16.mxu0 0
    %958 = vmatpush1.bf16.msra.mxu0 0
    %959 = vmatprep.subr.bf16.mxu0 0
    %960 = vmatpush1.bf16.msra.mxu0 0
    %961 = vmatprep.subr.bf16.mxu0 0
    %962 = vmatpush1.bf16.msra.mxu0 0
    %963 = vmatprep.mubr.bf16.mxu0 0
    %964 = vmatmul.mubr.bf16.gmra.mrb[0].mxu0 %v930
    %v965 = vpop.f32.mrb[0].mxu0
    %v966 = vadd.f32 0.0, %v965
    %v967 = vpop.f32.mrb[0].mxu0
    %v968 = vadd.f32 0.0, %v967
    %v969 = vpop.f32.mrb[0].mxu0
    %v970 = vpop.f32.mrb[0].mxu0
    %971 = vdwg.mxu0
    %972 = vmatprep.subr.bf16.mxu0 0
    %973 = vmatpush1.bf16.msra.mxu0 %v446
    %974 = vmatprep.subr.bf16.mxu0 0
    %975 = vmatpush1.bf16.msra.mxu0 %v449
    %976 = vmatprep.subr.bf16.mxu0 0
    %977 = vmatpush1.bf16.msra.mxu0 %v452
    %978 = vmatprep.subr.bf16.mxu0 0
    %979 = vmatpush1.bf16.msra.mxu0 %v455
    %980 = vmatprep.subr.bf16.mxu0 0
    %981 = vmatpush1.bf16.msra.mxu0 %v458
    %982 = vmatprep.subr.bf16.mxu0 0
    %983 = vmatpush1.bf16.msra.mxu0 %v461
    %984 = vmatprep.subr.bf16.mxu0 0
    %985 = vmatpush1.bf16.msra.mxu0 %v464
    %986 = vmatprep.subr.bf16.mxu0 0
    %987 = vmatpush1.bf16.msra.mxu0 %v467
    %988 = vmatprep.subr.bf16.mxu0 0
    %989 = vmatpush1.bf16.msra.mxu0 0
    %990 = vmatprep.subr.bf16.mxu0 0
    %991 = vmatpush1.bf16.msra.mxu0 0
    %992 = vmatprep.subr.bf16.mxu0 0
    %993 = vmatpush1.bf16.msra.mxu0 0
    %994 = vmatprep.subr.bf16.mxu0 0
    %995 = vmatpush1.bf16.msra.mxu0 0
    %996 = vmatprep.subr.bf16.mxu0 0
    %997 = vmatpush1.bf16.msra.mxu0 0
    %998 = vmatprep.subr.bf16.mxu0 0
    %999 = vmatpush1.bf16.msra.mxu0 0
    %1000 = vmatprep.subr.bf16.mxu0 0
    %1001 = vmatpush1.bf16.msra.mxu0 0
    %1002 = vmatprep.subr.bf16.mxu0 0
    %1003 = vmatpush1.bf16.msra.mxu0 0
    %1004 = vmatprep.mubr.bf16.mxu0 0
    %1005 = vmatmul.mubr.bf16.gmra.mrb[0].mxu0 %v930
    %v1006 = vpop.f32.mrb[0].mxu0
    %v1007 = vadd.f32 0.0, %v1006
    %v1008 = vpop.f32.mrb[0].mxu0
    %v1009 = vpop.f32.mrb[0].mxu0
    %v1010 = vpop.f32.mrb[0].mxu0
    %1011 = vdwg.mxu0
    %v1012 = vadd.f32 %v927, %v966
    %v1013 = vxor.u32 %v1012, 2147483648
    %v1014 = vmul.f32 %v1013, 1.442695
    %v1015 = vpow.pop %v1014
    %v1016 = vadd.f32 %v1015, 1.0
    %v1017 = vrcp.pop %v1016
    %v1018 = vmul.f32 1.0, %v1017
    %v1019 = vadd.f32 %v928, %v968
    %v1020 = vxor.u32 %v1019, 2147483648
    %v1021 = vmul.f32 %v1020, 1.442695
    %v1022 = vpow.pop %v1021
    %v1023 = vadd.f32 %v1022, 1.0
    %v1024 = vrcp.pop %v1023
    %v1025 = vmul.f32 1.0, %v1024
    %v1026 = vadd.f32 %v1007, %v357
    %v1027 = vmul.f32 %v1018, %v1026
    %v1028 = vadd.f32 %v929, %v1027
    %v1029 = vtanh.pop %v1028
    %v1030 = vsub.f32 1.0, %v1025
    %v1031 = vmul.f32 %v1030, %v1029
    %v1032 = vmul.f32 %v1025, %v923
    %v1033 = vadd.f32 %v1031, %v1032
    %s1034 = scalar_lea.vmem [#allocation3], 32
    %1035 = vst [vmem:[%s1034] sm:$0xff] %v1033
    %s1036 = scalar_lea.vmem [#allocation2], 120
    %v1037 = vld [vmem:[%s1036] sm:$0xff]
    %v1038 = vld [vmem:[%s1036 + $0x8] sm:$0xff]
    %v1039 = vld [vmem:[%s1036 + $0x10] sm:$0xff]
    %v1040 = vpack.c.bf16 %v1033, %v1033
    %1041 = vmatprep.subr.bf16.mxu0 %v445
    %1042 = vmatpush1.bf16.msra.mxu0 %v444
    %1043 = vmatprep.subr.bf16.mxu0 %v448
    %1044 = vmatpush1.bf16.msra.mxu0 %v447
    %1045 = vmatprep.subr.bf16.mxu0 %v451
    %1046 = vmatpush1.bf16.msra.mxu0 %v450
    %1047 = vmatprep.subr.bf16.mxu0 %v454
    %1048 = vmatpush1.bf16.msra.mxu0 %v453
    %1049 = vmatprep.subr.bf16.mxu0 %v457
    %1050 = vmatpush1.bf16.msra.mxu0 %v456
    %1051 = vmatprep.subr.bf16.mxu0 %v460
    %1052 = vmatpush1.bf16.msra.mxu0 %v459
    %1053 = vmatprep.subr.bf16.mxu0 %v463
    %1054 = vmatpush1.bf16.msra.mxu0 %v462
    %1055 = vmatprep.subr.bf16.mxu0 %v466
    %1056 = vmatpush1.bf16.msra.mxu0 %v465
    %1057 = vmatprep.subr.bf16.mxu0 0
    %1058 = vmatpush1.bf16.msra.mxu0 0
    %1059 = vmatprep.subr.bf16.mxu0 0
    %1060 = vmatpush1.bf16.msra.mxu0 0
    %1061 = vmatprep.subr.bf16.mxu0 0
    %1062 = vmatpush1.bf16.msra.mxu0 0
    %1063 = vmatprep.subr.bf16.mxu0 0
    %1064 = vmatpush1.bf16.msra.mxu0 0
    %1065 = vmatprep.subr.bf16.mxu0 0
    %1066 = vmatpush1.bf16.msra.mxu0 0
    %1067 = vmatprep.subr.bf16.mxu0 0
    %1068 = vmatpush1.bf16.msra.mxu0 0
    %1069 = vmatprep.subr.bf16.mxu0 0
    %1070 = vmatpush1.bf16.msra.mxu0 0
    %1071 = vmatprep.subr.bf16.mxu0 0
    %1072 = vmatpush1.bf16.msra.mxu0 0
    %1073 = vmatprep.mubr.bf16.mxu0 0
    %1074 = vmatmul.mubr.bf16.gmra.mrb[0].mxu0 %v1040
    %v1075 = vpop.f32.mrb[0].mxu0
    %v1076 = vadd.f32 0.0, %v1075
    %v1077 = vpop.f32.mrb[0].mxu0
    %v1078 = vadd.f32 0.0, %v1077
    %v1079 = vpop.f32.mrb[0].mxu0
    %v1080 = vpop.f32.mrb[0].mxu0
    %1081 = vdwg.mxu0
    %1082 = vmatprep.subr.bf16.mxu0 0
    %1083 = vmatpush1.bf16.msra.mxu0 %v446
    %1084 = vmatprep.subr.bf16.mxu0 0
    %1085 = vmatpush1.bf16.msra.mxu0 %v449
    %1086 = vmatprep.subr.bf16.mxu0 0
    %1087 = vmatpush1.bf16.msra.mxu0 %v452
    %1088 = vmatprep.subr.bf16.mxu0 0
    %1089 = vmatpush1.bf16.msra.mxu0 %v455
    %1090 = vmatprep.subr.bf16.mxu0 0
    %1091 = vmatpush1.bf16.msra.mxu0 %v458
    %1092 = vmatprep.subr.bf16.mxu0 0
    %1093 = vmatpush1.bf16.msra.mxu0 %v461
    %1094 = vmatprep.subr.bf16.mxu0 0
    %1095 = vmatpush1.bf16.msra.mxu0 %v464
    %1096 = vmatprep.subr.bf16.mxu0 0
    %1097 = vmatpush1.bf16.msra.mxu0 %v467
    %1098 = vmatprep.subr.bf16.mxu0 0
    %1099 = vmatpush1.bf16.msra.mxu0 0
    %1100 = vmatprep.subr.bf16.mxu0 0
    %1101 = vmatpush1.bf16.msra.mxu0 0
    %1102 = vmatprep.subr.bf16.mxu0 0
    %1103 = vmatpush1.bf16.msra.mxu0 0
    %1104 = vmatprep.subr.bf16.mxu0 0
    %1105 = vmatpush1.bf16.msra.mxu0 0
    %1106 = vmatprep.subr.bf16.mxu0 0
    %1107 = vmatpush1.bf16.msra.mxu0 0
    %1108 = vmatprep.subr.bf16.mxu0 0
    %1109 = vmatpush1.bf16.msra.mxu0 0
    %1110 = vmatprep.subr.bf16.mxu0 0
    %1111 = vmatpush1.bf16.msra.mxu0 0
    %1112 = vmatprep.subr.bf16.mxu0 0
    %1113 = vmatpush1.bf16.msra.mxu0 0
    %1114 = vmatprep.mubr.bf16.mxu0 0
    %1115 = vmatmul.mubr.bf16.gmra.mrb[0].mxu0 %v1040
    %v1116 = vpop.f32.mrb[0].mxu0
    %v1117 = vadd.f32 0.0, %v1116
    %v1118 = vpop.f32.mrb[0].mxu0
    %v1119 = vpop.f32.mrb[0].mxu0
    %v1120 = vpop.f32.mrb[0].mxu0
    %1121 = vdwg.mxu0
    %v1122 = vadd.f32 %v1037, %v1076
    %v1123 = vxor.u32 %v1122, 2147483648
    %v1124 = vmul.f32 %v1123, 1.442695
    %v1125 = vpow.pop %v1124
    %v1126 = vadd.f32 %v1125, 1.0
    %v1127 = vrcp.pop %v1126
    %v1128 = vmul.f32 1.0, %v1127
    %v1129 = vadd.f32 %v1038, %v1078
    %v1130 = vxor.u32 %v1129, 2147483648
    %v1131 = vmul.f32 %v1130, 1.442695
    %v1132 = vpow.pop %v1131
    %v1133 = vadd.f32 %v1132, 1.0
    %v1134 = vrcp.pop %v1133
    %v1135 = vmul.f32 1.0, %v1134
    %v1136 = vadd.f32 %v1117, %v357
    %v1137 = vmul.f32 %v1128, %v1136
    %v1138 = vadd.f32 %v1039, %v1137
    %v1139 = vtanh.pop %v1138
    %v1140 = vsub.f32 1.0, %v1135
    %v1141 = vmul.f32 %v1140, %v1139
    %v1142 = vmul.f32 %v1135, %v1033
    %v1143 = vadd.f32 %v1141, %v1142
    %s1144 = scalar_lea.vmem [#allocation3], 40
    %1145 = vst [vmem:[%s1144] sm:$0xff] %v1143
    %s1146 = scalar_lea.vmem [#allocation2], 144
    %v1147 = vld [vmem:[%s1146] sm:$0xff]
    %v1148 = vld [vmem:[%s1146 + $0x8] sm:$0xff]
    %v1149 = vld [vmem:[%s1146 + $0x10] sm:$0xff]
    %v1150 = vpack.c.bf16 %v1143, %v1143
    %1151 = vmatprep.subr.bf16.mxu0 %v445
    %1152 = vmatpush1.bf16.msra.mxu0 %v444
    %1153 = vmatprep.subr.bf16.mxu0 %v448
    %1154 = vmatpush1.bf16.msra.mxu0 %v447
    %1155 = vmatprep.subr.bf16.mxu0 %v451
    %1156 = vmatpush1.bf16.msra.mxu0 %v450
    %1157 = vmatprep.subr.bf16.mxu0 %v454
    %1158 = vmatpush1.bf16.msra.mxu0 %v453
    %1159 = vmatprep.subr.bf16.mxu0 %v457
    %1160 = vmatpush1.bf16.msra.mxu0 %v456
    %1161 = vmatprep.subr.bf16.mxu0 %v460
    %1162 = vmatpush1.bf16.msra.mxu0 %v459
    %1163 = vmatprep.subr.bf16.mxu0 %v463
    %1164 = vmatpush1.bf16.msra.mxu0 %v462
    %1165 = vmatprep.subr.bf16.mxu0 %v466
    %1166 = vmatpush1.bf16.msra.mxu0 %v465
    %1167 = vmatprep.subr.bf16.mxu0 0
    %1168 = vmatpush1.bf16.msra.mxu0 0
    %1169 = vmatprep.subr.bf16.mxu0 0
    %1170 = vmatpush1.bf16.msra.mxu0 0
    %1171 = vmatprep.subr.bf16.mxu0 0
    %1172 = vmatpush1.bf16.msra.mxu0 0
    %1173 = vmatprep.subr.bf16.mxu0 0
    %1174 = vmatpush1.bf16.msra.mxu0 0
    %1175 = vmatprep.subr.bf16.mxu0 0
    %1176 = vmatpush1.bf16.msra.mxu0 0
    %1177 = vmatprep.subr.bf16.mxu0 0
    %1178 = vmatpush1.bf16.msra.mxu0 0
    %1179 = vmatprep.subr.bf16.mxu0 0
    %1180 = vmatpush1.bf16.msra.mxu0 0
    %1181 = vmatprep.subr.bf16.mxu0 0
    %1182 = vmatpush1.bf16.msra.mxu0 0
    %1183 = vmatprep.mubr.bf16.mxu0 0
    %1184 = vmatmul.mubr.bf16.gmra.mrb[0].mxu0 %v1150
    %v1185 = vpop.f32.mrb[0].mxu0
    %v1186 = vadd.f32 0.0, %v1185
    %v1187 = vpop.f32.mrb[0].mxu0
    %v1188 = vadd.f32 0.0, %v1187
    %v1189 = vpop.f32.mrb[0].mxu0
    %v1190 = vpop.f32.mrb[0].mxu0
    %1191 = vdwg.mxu0
    %1192 = vmatprep.subr.bf16.mxu0 0
    %1193 = vmatpush1.bf16.msra.mxu0 %v446
    %1194 = vmatprep.subr.bf16.mxu0 0
    %1195 = vmatpush1.bf16.msra.mxu0 %v449
    %1196 = vmatprep.subr.bf16.mxu0 0
    %1197 = vmatpush1.bf16.msra.mxu0 %v452
    %1198 = vmatprep.subr.bf16.mxu0 0
    %1199 = vmatpush1.bf16.msra.mxu0 %v455
    %1200 = vmatprep.subr.bf16.mxu0 0
    %1201 = vmatpush1.bf16.msra.mxu0 %v458
    %1202 = vmatprep.subr.bf16.mxu0 0
    %1203 = vmatpush1.bf16.msra.mxu0 %v461
    %1204 = vmatprep.subr.bf16.mxu0 0
    %1205 = vmatpush1.bf16.msra.mxu0 %v464
    %1206 = vmatprep.subr.bf16.mxu0 0
    %1207 = vmatpush1.bf16.msra.mxu0 %v467
    %1208 = vmatprep.subr.bf16.mxu0 0
    %1209 = vmatpush1.bf16.msra.mxu0 0
    %1210 = vmatprep.subr.bf16.mxu0 0
    %1211 = vmatpush1.bf16.msra.mxu0 0
    %1212 = vmatprep.subr.bf16.mxu0 0
    %1213 = vmatpush1.bf16.msra.mxu0 0
    %1214 = vmatprep.subr.bf16.mxu0 0
    %1215 = vmatpush1.bf16.msra.mxu0 0
    %1216 = vmatprep.subr.bf16.mxu0 0
    %1217 = vmatpush1.bf16.msra.mxu0 0
    %1218 = vmatprep.subr.bf16.mxu0 0
    %1219 = vmatpush1.bf16.msra.mxu0 0
    %1220 = vmatprep.subr.bf16.mxu0 0
    %1221 = vmatpush1.bf16.msra.mxu0 0
    %1222 = vmatprep.subr.bf16.mxu0 0
    %1223 = vmatpush1.bf16.msra.mxu0 0
    %1224 = vmatprep.mubr.bf16.mxu0 0
    %1225 = vmatmul.mubr.bf16.gmra.mrb[0].mxu0 %v1150
    %v1226 = vpop.f32.mrb[0].mxu0
    %v1227 = vadd.f32 0.0, %v1226
    %v1228 = vpop.f32.mrb[0].mxu0
    %v1229 = vpop.f32.mrb[0].mxu0
    %v1230 = vpop.f32.mrb[0].mxu0
    %1231 = vdwg.mxu0
    %v1232 = vadd.f32 %v1147, %v1186
    %v1233 = vxor.u32 %v1232, 2147483648
    %v1234 = vmul.f32 %v1233, 1.442695
    %v1235 = vpow.pop %v1234
    %v1236 = vadd.f32 %v1235, 1.0
    %v1237 = vrcp.pop %v1236
    %v1238 = vmul.f32 1.0, %v1237
    %v1239 = vadd.f32 %v1148, %v1188
    %v1240 = vxor.u32 %v1239, 2147483648
    %v1241 = vmul.f32 %v1240, 1.442695
    %v1242 = vpow.pop %v1241
    %v1243 = vadd.f32 %v1242, 1.0
    %v1244 = vrcp.pop %v1243
    %v1245 = vmul.f32 1.0, %v1244
    %v1246 = vadd.f32 %v1227, %v357
    %v1247 = vmul.f32 %v1238, %v1246
    %v1248 = vadd.f32 %v1149, %v1247
    %v1249 = vtanh.pop %v1248
    %v1250 = vsub.f32 1.0, %v1245
    %v1251 = vmul.f32 %v1250, %v1249
    %v1252 = vmul.f32 %v1245, %v1143
    %v1253 = vadd.f32 %v1251, %v1252
    %s1254 = scalar_lea.vmem [#allocation3], 48
    %1255 = vst [vmem:[%s1254] sm:$0xff] %v1253
    %s1256 = scalar_lea.vmem [#allocation2], 168
    %v1257 = vld [vmem:[%s1256] sm:$0xff]
    %v1258 = vld [vmem:[%s1256 + $0x8] sm:$0xff]
    %v1259 = vld [vmem:[%s1256 + $0x10] sm:$0xff]
    %v1260 = vpack.c.bf16 %v1253, %v1253
    %1261 = vmatprep.subr.bf16.mxu0 %v445
    %1262 = vmatpush1.bf16.msra.mxu0 %v444
    %1263 = vmatprep.subr.bf16.mxu0 %v448
    %1264 = vmatpush1.bf16.msra.mxu0 %v447
    %1265 = vmatprep.subr.bf16.mxu0 %v451
    %1266 = vmatpush1.bf16.msra.mxu0 %v450
    %1267 = vmatprep.subr.bf16.mxu0 %v454
    %1268 = vmatpush1.bf16.msra.mxu0 %v453
    %1269 = vmatprep.subr.bf16.mxu0 %v457
    %1270 = vmatpush1.bf16.msra.mxu0 %v456
    %1271 = vmatprep.subr.bf16.mxu0 %v460
    %1272 = vmatpush1.bf16.msra.mxu0 %v459
    %1273 = vmatprep.subr.bf16.mxu0 %v463
    %1274 = vmatpush1.bf16.msra.mxu0 %v462
    %1275 = vmatprep.subr.bf16.mxu0 %v466
    %1276 = vmatpush1.bf16.msra.mxu0 %v465
    %1277 = vmatprep.subr.bf16.mxu0 0
    %1278 = vmatpush1.bf16.msra.mxu0 0
    %1279 = vmatprep.subr.bf16.mxu0 0
    %1280 = vmatpush1.bf16.msra.mxu0 0
    %1281 = vmatprep.subr.bf16.mxu0 0
    %1282 = vmatpush1.bf16.msra.mxu0 0
    %1283 = vmatprep.subr.bf16.mxu0 0
    %1284 = vmatpush1.bf16.msra.mxu0 0
    %1285 = vmatprep.subr.bf16.mxu0 0
    %1286 = vmatpush1.bf16.msra.mxu0 0
    %1287 = vmatprep.subr.bf16.mxu0 0
    %1288 = vmatpush1.bf16.msra.mxu0 0
    %1289 = vmatprep.subr.bf16.mxu0 0
    %1290 = vmatpush1.bf16.msra.mxu0 0
    %1291 = vmatprep.subr.bf16.mxu0 0
    %1292 = vmatpush1.bf16.msra.mxu0 0
    %1293 = vmatprep.mubr.bf16.mxu0 0
    %1294 = vmatmul.mubr.bf16.gmra.mrb[0].mxu0 %v1260
    %v1295 = vpop.f32.mrb[0].mxu0
    %v1296 = vadd.f32 0.0, %v1295
    %v1297 = vpop.f32.mrb[0].mxu0
    %v1298 = vadd.f32 0.0, %v1297
    %v1299 = vpop.f32.mrb[0].mxu0
    %v1300 = vpop.f32.mrb[0].mxu0
    %1301 = vdwg.mxu0
    %1302 = vmatprep.subr.bf16.mxu0 0
    %1303 = vmatpush1.bf16.msra.mxu0 %v446
    %1304 = vmatprep.subr.bf16.mxu0 0
    %1305 = vmatpush1.bf16.msra.mxu0 %v449
    %1306 = vmatprep.subr.bf16.mxu0 0
    %1307 = vmatpush1.bf16.msra.mxu0 %v452
    %1308 = vmatprep.subr.bf16.mxu0 0
    %1309 = vmatpush1.bf16.msra.mxu0 %v455
    %1310 = vmatprep.subr.bf16.mxu0 0
    %1311 = vmatpush1.bf16.msra.mxu0 %v458
    %1312 = vmatprep.subr.bf16.mxu0 0
    %1313 = vmatpush1.bf16.msra.mxu0 %v461
    %1314 = vmatprep.subr.bf16.mxu0 0
    %1315 = vmatpush1.bf16.msra.mxu0 %v464
    %1316 = vmatprep.subr.bf16.mxu0 0
    %1317 = vmatpush1.bf16.msra.mxu0 %v467
    %1318 = vmatprep.subr.bf16.mxu0 0
    %1319 = vmatpush1.bf16.msra.mxu0 0
    %1320 = vmatprep.subr.bf16.mxu0 0
    %1321 = vmatpush1.bf16.msra.mxu0 0
    %1322 = vmatprep.subr.bf16.mxu0 0
    %1323 = vmatpush1.bf16.msra.mxu0 0
    %1324 = vmatprep.subr.bf16.mxu0 0
    %1325 = vmatpush1.bf16.msra.mxu0 0
    %1326 = vmatprep.subr.bf16.mxu0 0
    %1327 = vmatpush1.bf16.msra.mxu0 0
    %1328 = vmatprep.subr.bf16.mxu0 0
    %1329 = vmatpush1.bf16.msra.mxu0 0
    %1330 = vmatprep.subr.bf16.mxu0 0
    %1331 = vmatpush1.bf16.msra.mxu0 0
    %1332 = vmatprep.subr.bf16.mxu0 0
    %1333 = vmatpush1.bf16.msra.mxu0 0
    %1334 = vmatprep.mubr.bf16.mxu0 0
    %1335 = vmatmul.mubr.bf16.gmra.mrb[0].mxu0 %v1260
    %v1336 = vpop.f32.mrb[0].mxu0
    %v1337 = vadd.f32 0.0, %v1336
    %v1338 = vpop.f32.mrb[0].mxu0
    %v1339 = vpop.f32.mrb[0].mxu0
    %v1340 = vpop.f32.mrb[0].mxu0
    %1341 = vdwg.mxu0
    %v1342 = vadd.f32 %v1257, %v1296
    %v1343 = vxor.u32 %v1342, 2147483648
    %v1344 = vmul.f32 %v1343, 1.442695
    %v1345 = vpow.pop %v1344
    %v1346 = vadd.f32 %v1345, 1.0
    %v1347 = vrcp.pop %v1346
    %v1348 = vmul.f32 1.0, %v1347
    %v1349 = vadd.f32 %v1258, %v1298
    %v1350 = vxor.u32 %v1349, 2147483648
    %v1351 = vmul.f32 %v1350, 1.442695
    %v1352 = vpow.pop %v1351
    %v1353 = vadd.f32 %v1352, 1.0
    %v1354 = vrcp.pop %v1353
    %v1355 = vmul.f32 1.0, %v1354
    %v1356 = vadd.f32 %v1337, %v357
    %v1357 = vmul.f32 %v1348, %v1356
    %v1358 = vadd.f32 %v1259, %v1357
    %v1359 = vtanh.pop %v1358
    %v1360 = vsub.f32 1.0, %v1355
    %v1361 = vmul.f32 %v1360, %v1359
    %v1362 = vmul.f32 %v1355, %v1253
    %v1363 = vadd.f32 %v1361, %v1362
    %s1364 = scalar_lea.vmem [#allocation3], 56
    %1365 = vst [vmem:[%s1364] sm:$0xff] %v1363
    %1366 = vst [vmem:[%s9] sm:$0xff] %v1363
    %v1367 = vld [vmem:[#allocation3] sm:$0xff]
    %v1368 = vld [vmem:[#allocation3 + $0x8] sm:$0xff]
    %v1369 = vld [vmem:[#allocation3 + $0x10] sm:$0xff]
    %v1370 = vld [vmem:[#allocation3 + $0x18] sm:$0xff]
    %v1371 = vld [vmem:[#allocation3 + $0x20] sm:$0xff]
    %v1372 = vld [vmem:[#allocation3 + $0x28] sm:$0xff]
    %v1373 = vld [vmem:[#allocation3 + $0x30] sm:$0xff]
    %v1374 = vld [vmem:[#allocation3 + $0x38] sm:$0xff]
    %v1375 = vpack.c.bf16 %v1368, %v1367
    %v1376 = vpack.c.bf16 %v1370, %v1369
    %v1377 = vpack.c.bf16 %v1372, %v1371
    %v1378 = vpack.c.bf16 %v1374, %v1373
    %v1379 = vld [vmem:[%s6] sm:$0xf]
    %v1380 = vld [vmem:[%s6 + $0x4] sm:$0xf]
    %v1381 = vld [vmem:[%s6 + $0x8] sm:$0xf]
    %v1382 = vld [vmem:[%s6 + $0xc] sm:$0xf]
    %v1383 = vld [vmem:[%s6 + $0x10] sm:$0xf]
    %v1384 = vld [vmem:[%s6 + $0x14] sm:$0xf]
    %v1385 = vld [vmem:[%s6 + $0x18] sm:$0xf]
    %v1386 = vld [vmem:[%s6 + $0x1c] sm:$0xf]
    %v1387 = vld [vmem:[%s6 + $0x20] sm:$0xf]
    %v1388 = vld [vmem:[%s6 + $0x24] sm:$0xf]
    %v1389 = vld [vmem:[%s6 + $0x28] sm:$0xf]
    %v1390 = vld [vmem:[%s6 + $0x2c] sm:$0xf]
    %v1391 = vld [vmem:[%s6 + $0x30] sm:$0xf]
    %v1392 = vld [vmem:[%s6 + $0x34] sm:$0xf]
    %v1393 = vld [vmem:[%s6 + $0x38] sm:$0xf]
    %v1394 = vld [vmem:[%s6 + $0x3c] sm:$0xf]
    %v1395 = vld [vmem:[%s7] sm:$0x1]
    %v1397 = vlaneseq
    %v1398 = vshrl.u32 %v1397, 7
    %v1399 = vsub.s32 0, %v1398
    %v1400 = vrot.slane %v1395, %v1399
    %v1418 = vunpack.c.l.b16 %v1379
    %v1419 = vunpack.c.l.b16 %v1380
    %v1420 = vunpack.c.l.b16 %v1381
    %v1421 = vunpack.c.l.b16 %v1382
    %v1422 = vunpack.c.l.b16 %v1383
    %v1423 = vunpack.c.l.b16 %v1384
    %v1424 = vunpack.c.l.b16 %v1385
    %v1425 = vunpack.c.l.b16 %v1386
    %v1426 = vunpack.c.l.b16 %v1387
    %v1427 = vunpack.c.l.b16 %v1388
    %v1428 = vunpack.c.l.b16 %v1389
    %v1429 = vunpack.c.l.b16 %v1390
    %v1430 = vunpack.c.l.b16 %v1391
    %v1431 = vunpack.c.l.b16 %v1392
    %v1432 = vunpack.c.l.b16 %v1393
    %v1433 = vunpack.c.l.b16 %v1394
    %v1434 = vpack.c.b16 %v1419, %v1418
    %v1435 = vpack.c.b16 %v1421, %v1420
    %v1436 = vpack.c.b16 %v1423, %v1422
    %v1437 = vpack.c.b16 %v1425, %v1424
    %v1438 = vpack.c.b16 %v1427, %v1426
    %v1439 = vpack.c.b16 %v1429, %v1428
    %v1440 = vpack.c.b16 %v1431, %v1430
    %v1441 = vpack.c.b16 %v1433, %v1432
    %1450 = vmatprep.subr.bf16.mxu0 0
    %1451 = vmatpush1.bf16.msra.mxu0 %v1434
    %1452 = vmatprep.subr.bf16.mxu0 0
    %1453 = vmatpush1.bf16.msra.mxu0 %v1435
    %1454 = vmatprep.subr.bf16.mxu0 0
    %1455 = vmatpush1.bf16.msra.mxu0 %v1436
    %1456 = vmatprep.subr.bf16.mxu0 0
    %1457 = vmatpush1.bf16.msra.mxu0 %v1437
    %1458 = vmatprep.subr.bf16.mxu0 0
    %1459 = vmatpush1.bf16.msra.mxu0 %v1438
    %1460 = vmatprep.subr.bf16.mxu0 0
    %1461 = vmatpush1.bf16.msra.mxu0 %v1439
    %1462 = vmatprep.subr.bf16.mxu0 0
    %1463 = vmatpush1.bf16.msra.mxu0 %v1440
    %1464 = vmatprep.subr.bf16.mxu0 0
    %1465 = vmatpush1.bf16.msra.mxu0 %v1441
    %1466 = vmatprep.subr.bf16.mxu0 0
    %1467 = vmatpush1.bf16.msra.mxu0 0
    %1468 = vmatprep.subr.bf16.mxu0 0
    %1469 = vmatpush1.bf16.msra.mxu0 0
    %1470 = vmatprep.subr.bf16.mxu0 0
    %1471 = vmatpush1.bf16.msra.mxu0 0
    %1472 = vmatprep.subr.bf16.mxu0 0
    %1473 = vmatpush1.bf16.msra.mxu0 0
    %1474 = vmatprep.subr.bf16.mxu0 0
    %1475 = vmatpush1.bf16.msra.mxu0 0
    %1476 = vmatprep.subr.bf16.mxu0 0
    %1477 = vmatpush1.bf16.msra.mxu0 0
    %1478 = vmatprep.subr.bf16.mxu0 0
    %1479 = vmatpush1.bf16.msra.mxu0 0
    %1480 = vmatprep.subr.bf16.mxu0 0
    %1481 = vmatpush1.bf16.msra.mxu0 0
    %1482 = vmatprep.mubr.bf16.mxu0 0
    %1483 = vmatmul.mubr.bf16.gmra.mrb[0].mxu0 %v1375
    %v1484 = vpop.f32.mrb[0].mxu0
    %v1485 = vadd.f32 %v1400, %v1484
    %v1486 = vpop.f32.mrb[0].mxu0
    %v1487 = vpop.f32.mrb[0].mxu0
    %v1488 = vadd.f32 %v1400, %v1487
    %v1489 = vpop.f32.mrb[0].mxu0
    %1490 = vmatprep.mubr.bf16.mxu0 0
    %1491 = vmatmul.mubr.bf16.gmra.mrb[0].mxu0 %v1376
    %v1492 = vpop.f32.mrb[0].mxu0
    %v1493 = vadd.f32 %v1400, %v1492
    %v1494 = vpop.f32.mrb[0].mxu0
    %v1495 = vpop.f32.mrb[0].mxu0
    %v1496 = vadd.f32 %v1400, %v1495
    %v1497 = vpop.f32.mrb[0].mxu0
    %1498 = vmatprep.mubr.bf16.mxu0 0
    %1499 = vmatmul.mubr.bf16.gmra.mrb[0].mxu0 %v1377
    %v1500 = vpop.f32.mrb[0].mxu0
    %v1501 = vadd.f32 %v1400, %v1500
    %v1502 = vpop.f32.mrb[0].mxu0
    %v1503 = vpop.f32.mrb[0].mxu0
    %v1504 = vadd.f32 %v1400, %v1503
    %v1505 = vpop.f32.mrb[0].mxu0
    %1506 = vmatprep.mubr.bf16.mxu0 0
    %1507 = vmatmul.mubr.bf16.gmra.mrb[0].mxu0 %v1378
    %v1508 = vpop.f32.mrb[0].mxu0
    %v1509 = vadd.f32 %v1400, %v1508
    %v1510 = vpop.f32.mrb[0].mxu0
    %v1511 = vpop.f32.mrb[0].mxu0
    %v1512 = vadd.f32 %v1400, %v1511
    %v1513 = vpop.f32.mrb[0].mxu0
    %1514 = vdwg.mxu0
    %1515 = vst [vmem:[%s8] sm:$0xff] %v1485
    %1516 = vst [vmem:[%s8 + $0x8] sm:$0xff] %v1488
    %1517 = vst [vmem:[%s8 + $0x10] sm:$0xff] %v1493
    %1518 = vst [vmem:[%s8 + $0x18] sm:$0xff] %v1496
    %1519 = vst [vmem:[%s8 + $0x20] sm:$0xff] %v1501
    %1520 = vst [vmem:[%s8 + $0x28] sm:$0xff] %v1504
    %1521 = vst [vmem:[%s8 + $0x30] sm:$0xff] %v1509
    %1522 = vst [vmem:[%s8 + $0x38] sm:$0xff] %v1512
    // Predicated region
    $region42: #{state_tracker_gru_forward.1} parent=1 // pred_check
      _
    $region43: #{state_tracker_gru_forward.1} parent=1 // pred_check_branch
      %1524 = sbr.rel (0) target = $region45
    $region44: #{state_tracker_gru_forward.1} parent=1 // pred_region
      _
    $region45: #{state_tracker_gru_forward.1} parent=1 // pred_fallthru
      _
    // Predicated region
    $region46: #{state_tracker_gru_forward.1} parent=1 // pred_check
      _
    $region47: #{state_tracker_gru_forward.1} parent=1 // pred_check_branch
      %1526 = sbr.rel (0) target = $region49
    $region48: #{state_tracker_gru_forward.1} parent=1 // pred_region
      _
    $region49: #{state_tracker_gru_forward.1} parent=1 // pred_fallthru
      _
    // Predicated region
    $region50: #{state_tracker_gru_forward.1} parent=1 // pred_check
      _
    $region51: #{state_tracker_gru_forward.1} parent=1 // pred_check_branch
      %1528 = sbr.rel (0) target = $region53
    $region52: #{state_tracker_gru_forward.1} parent=1 // pred_region
      _
    $region53: #{state_tracker_gru_forward.1} parent=1 // pred_fallthru
      _
    // Predicated region
    $region54: #{state_tracker_gru_forward.1} parent=1 // pred_check
      _
    $region55: #{state_tracker_gru_forward.1} parent=1 // pred_check_branch
      %1530 = sbr.rel (0) target = $region57
    $region56: #{state_tracker_gru_forward.1} parent=1 // pred_region
      _
    $region57: #{state_tracker_gru_forward.1} parent=1 // pred_fallthru
      _
    %1531 = vsyncpa [#allocation5], 1
    %1532 = vsyncpa [#allocation7], 1

</llo_original>
